<compile_context>
chip_gen: v7x
topology: tpu7x:2x2x1
jax: 0.10.0
libtpu: 0.0.40
codegen_flags: <defaults>
</compile_context>

<pallas_src>
import functools
import math

import jax
import jax.numpy as jnp
from jax.experimental import pallas as pl
from jax.experimental.pallas import tpu as pltpu


# ---------------------------------------------------------------------------
# In-kernel helpers
# ---------------------------------------------------------------------------

def _layer_norm(x, gamma, beta, eps=1e-5):
    # PyTorch nn.LayerNorm over the last dim (biased variance, eps=1e-5).
    mu = jnp.mean(x, axis=-1, keepdims=True)
    xc = x - mu
    var = jnp.mean(xc * xc, axis=-1, keepdims=True)
    inv = jax.lax.rsqrt(var + eps)
    return xc * inv * gamma + beta


# ---------------------------------------------------------------------------
# Fused decoder-layer kernel
# ---------------------------------------------------------------------------

def _decoder_layer_kernel(x_ref, mask_ref,
                          wqkv_ref, wo_ref,
                          ln1_g_ref, ln1_b_ref,
                          w1_ref, w2_ref,
                          ln2_g_ref, ln2_b_ref,
                          o_ref,
                          kv_scratch,
                          *, n_head, d_k, d_v, q_tile, compute_dtype):
    f32 = jnp.float32
    qt = pl.program_id(1)
    hk = n_head * d_k
    hv = n_head * d_v
    scale = 1.0 / math.sqrt(d_k)

    # ---- K/V projection for the whole sequence, cached across q-tiles ------
    @pl.when(qt == 0)
    def _():
        xk = x_ref[0].astype(compute_dtype)                   # (T, d_model)
        kv = jnp.dot(xk, wqkv_ref[:, hk:],                    # (T, hk+hv) f32 acc
                     preferred_element_type=f32)
        kv_scratch[...] = kv.astype(kv_scratch.dtype)

    # ---- Q projection for this q-tile (rows sliced from the resident block)
    row0 = pl.multiple_of(qt * q_tile, q_tile)
    xq = x_ref[0, pl.ds(row0, q_tile), :]                     # (TQ, d_model) f32
    q_all = jnp.dot(xq.astype(compute_dtype), wqkv_ref[:, :hk],
                    preferred_element_type=f32)               # (TQ, H*d_k)

    k_all = kv_scratch[:, :hk]                                # (T, H*d_k) compute_dtype
    v_all = kv_scratch[:, hk:]                                # (T, H*d_v)
    mask = mask_ref[0]                                        # (TQ, T) int8

    # ---- per-head masked softmax attention; contexts gathered lane-dense ---
    # TODO(synk): for long sequences, tile the key axis flash-style instead of
    # materializing the full (TQ, T) score tile per head.
    ctx_parts = []
    for h in range(n_head):                                   # small static unroll
        q_h = q_all[:, h * d_k:(h + 1) * d_k].astype(compute_dtype)
        k_h = k_all[:, h * d_k:(h + 1) * d_k]
        v_h = v_all[:, h * d_v:(h + 1) * d_v]
        s = jax.lax.dot_general(q_h, k_h, (((1,), (1,)), ((), ())),
                                preferred_element_type=f32) * scale   # (TQ, T)
        s = jnp.where(mask != 0, jnp.float32(-1e9), s)        # masked_fill_
        m = jnp.max(s, axis=-1, keepdims=True)
        e = jnp.exp(s - m)
        p = e * pl.reciprocal(jnp.sum(e, axis=-1, keepdims=True), approx=True)
        ctx_parts.append(jnp.dot(p.astype(compute_dtype), v_h,
                                 preferred_element_type=f32))  # (TQ, d_v)
    ctx = jnp.concatenate(ctx_parts, axis=-1)                  # (TQ, H*d_v)

    # ---- single full-width output projection + residual + LayerNorm --------
    attn_out = jnp.dot(ctx.astype(compute_dtype), wo_ref[...],
                       preferred_element_type=f32)             # (TQ, d_model)
    y = _layer_norm(attn_out + xq, ln1_g_ref[...], ln1_b_ref[...])

    # ---- position-wise FFN: fc2(relu(fc1(y))) + residual + LayerNorm -------
    h1 = jnp.maximum(
        jnp.dot(y.astype(compute_dtype), w1_ref[...],
                preferred_element_type=f32), 0.0)              # (TQ, d_ff)
    h2 = jnp.dot(h1.astype(compute_dtype), w2_ref[...],
                 preferred_element_type=f32)                   # (TQ, d_model)
    z = _layer_norm(h2 + y, ln2_g_ref[...], ln2_b_ref[...])
    o_ref[0] = z.astype(o_ref.dtype)


# ---------------------------------------------------------------------------
# Wrapper
# ---------------------------------------------------------------------------

@functools.partial(jax.jit, static_argnames=("q_tile", "use_bf16_matmul"))
def decoder_layer_forward(params, dec_inputs, dec_self_attn_mask,
                          *, q_tile=None, use_bf16_matmul=True):
    """dec_inputs: (B, T, d_model) f32; dec_self_attn_mask: (B, T, T) bool/int
    (nonzero = masked).  Returns (B, T, d_model) f32."""
    B, T, d_model = dec_inputs.shape
    H, _, d_k = params["wq"].shape
    d_v = params["wv"].shape[2]
    d_ff = params["w1"].shape[1]

    if q_tile is None:
        q_tile = T
        for cand in (512, 256, 128):        # bigger per-step tiles amortize overhead
            if T > cand and T % cand == 0:
                q_tile = cand
                break
    assert T % q_tile == 0 and (q_tile % 8 == 0 or q_tile == T), (T, q_tile)
    n_q_tiles = T // q_tile

    compute_dtype = jnp.bfloat16 if use_bf16_matmul else jnp.float32

    x = dec_inputs.astype(jnp.float32)
    mask_i8 = (dec_self_attn_mask != 0).astype(jnp.int8)      # 4x less DMA than int32

    # Pack head-major weights into fused, lane-dense 2-D matrices (bf16 in HBM
    # when use_bf16_matmul so the MXU inputs need no per-step cast).
    def to2d(w):  # (H, d_model, d) -> (d_model, H*d)
        return jnp.transpose(w, (1, 0, 2)).reshape(d_model, -1)
    w_qkv = jnp.concatenate([to2d(params["wq"]), to2d(params["wk"]),
                             to2d(params["wv"])], axis=1).astype(compute_dtype)
    w_o = params["wo"].reshape(H * d_v, d_model).astype(compute_dtype)
    w1 = params["w1"].astype(compute_dtype)
    w2 = params["w2"].astype(compute_dtype)
    ln1_g = params["ln1_g"].reshape(1, d_model).astype(jnp.float32)
    ln1_b = params["ln1_b"].reshape(1, d_model).astype(jnp.float32)
    ln2_g = params["ln2_g"].reshape(1, d_model).astype(jnp.float32)
    ln2_b = params["ln2_b"].reshape(1, d_model).astype(jnp.float32)

    kernel = functools.partial(_decoder_layer_kernel,
                               n_head=H, d_k=d_k, d_v=d_v, q_tile=q_tile,
                               compute_dtype=compute_dtype)

    # Grid: batch (parallel, megacore) outer, q-tiles (arbitrary) inner so the
    # per-batch K/V cache in scratch is valid across q-tiles.
    return pl.pallas_call(
        kernel,
        out_shape=jax.ShapeDtypeStruct((B, T, d_model), jnp.float32),
        grid=(B, n_q_tiles),
        in_specs=[
            pl.BlockSpec((1, T, d_model),      lambda b, t: (b, 0, 0)),  # x (full seq)
            pl.BlockSpec((1, q_tile, T),       lambda b, t: (b, t, 0)),  # mask (int8)
            pl.BlockSpec((d_model, 2 * H * d_k + H * d_v),
                         lambda b, t: (0, 0)),                           # W_Q|W_K|W_V
            pl.BlockSpec((H * d_v, d_model),   lambda b, t: (0, 0)),     # W_O
            pl.BlockSpec((1, d_model),         lambda b, t: (0, 0)),     # LN1 gamma
            pl.BlockSpec((1, d_model),         lambda b, t: (0, 0)),     # LN1 beta
            pl.BlockSpec((d_model, d_ff),      lambda b, t: (0, 0)),     # fc1
            pl.BlockSpec((d_ff, d_model),      lambda b, t: (0, 0)),     # fc2
            pl.BlockSpec((1, d_model),         lambda b, t: (0, 0)),     # LN2 gamma
            pl.BlockSpec((1, d_model),         lambda b, t: (0, 0)),     # LN2 beta
        ],
        out_specs=pl.BlockSpec((1, q_tile, d_model), lambda b, t: (b, t, 0)),
        scratch_shapes=[pltpu.VMEM((T, H * d_k + H * d_v), compute_dtype)],  # K/V cache
        compiler_params=pltpu.CompilerParams(
            dimension_semantics=("parallel", "arbitrary"),
            vmem_limit_bytes=48 * 1024 * 1024),   # fits v7x's 64 MiB physical VMEM
    )(x, mask_i8, w_qkv, w_o, ln1_g, ln1_b, w1, w2, ln2_g, ln2_b)


# ---------------------------------------------------------------------------
# Pure-JAX reference (mirrors the PyTorch module) + params
# ---------------------------------------------------------------------------

def decoder_layer_ref(params, x, mask):
    hp = jax.lax.Precision.HIGHEST
    d_k = params["wq"].shape[2]
    q = jnp.einsum('btd,hdk->bhtk', x, params["wq"], precision=hp)
    k = jnp.einsum('btd,hdk->bhtk', x, params["wk"], precision=hp)
    v = jnp.einsum('btd,hdk->bhtk', x, params["wv"], precision=hp)
    s = jnp.einsum('bhqd,bhkd->bhqk', q, k, precision=hp) / math.sqrt(d_k)
    s = jnp.where(mask[:, None, :, :] != 0, -1e9, s)
    p = jax.nn.softmax(s, axis=-1)
    ctx = jnp.einsum('bhqk,bhkd->bhqd', p, v, precision=hp)
    attn_out = jnp.einsum('bhqd,hdm->bqm', ctx, params["wo"], precision=hp)
    y = _layer_norm(attn_out + x, params["ln1_g"], params["ln1_b"])
    h1 = jnp.maximum(jnp.einsum('bqd,df->bqf', y, params["w1"], precision=hp), 0.0)
    h2 = jnp.einsum('bqf,fd->bqd', h1, params["w2"], precision=hp)
    return _layer_norm(h2 + y, params["ln2_g"], params["ln2_b"])


def init_params(key, d_model=128, n_head=4, d_k=32, d_v=32, d_ff=256):
    ks = jax.random.split(key, 6)
    s = 0.05

    def n(k, shape):
        return (s * jax.random.normal(k, shape)).astype(jnp.float32)

    # Head-major weights: head h of PyTorch W_Q.weight[h*d_k:(h+1)*d_k, :].T
    return {
        "wq": n(ks[0], (n_head, d_model, d_k)),
        "wk": n(ks[1], (n_head, d_model, d_k)),
        "wv": n(ks[2], (n_head, d_model, d_v)),
        "wo": n(ks[3], (n_head, d_v, d_model)),
        "ln1_g": jnp.ones((d_model,), jnp.float32),
        "ln1_b": jnp.zeros((d_model,), jnp.float32),
        "w1": n(ks[4], (d_model, d_ff)),
        "w2": n(ks[5], (d_ff, d_model)),
        "ln2_g": jnp.ones((d_model,), jnp.float32),
        "ln2_b": jnp.zeros((d_model,), jnp.float32),
    }


# ---------------------------------------------------------------------------
# Demo
# ---------------------------------------------------------------------------

if __name__ == "__main__":
    key = jax.random.PRNGKey(0)
    k_par, k_in = jax.random.split(key)

    B, T, d_model, n_head, d_k, d_ff = 2, 16, 128, 4, 32, 256
    params = init_params(k_par, d_model=d_model, n_head=n_head,
                         d_k=d_k, d_v=d_k, d_ff=d_ff)

    dec_inputs = jax.random.normal(k_in, (B, T, d_model), dtype=jnp.float32)
    # Decoder self-attention mask (True = masked), e.g. the subsequent mask.
    causal = jnp.triu(jnp.ones((T, T), dtype=jnp.bool_), k=1)
    dec_self_attn_mask = jnp.broadcast_to(causal, (B, T, T))

    ref = decoder_layer_ref(params, dec_inputs, dec_self_attn_mask)

    # Default (bf16 MXU inputs, f32 accumulation / softmax / LayerNorm).
    out_bf16 = decoder_layer_forward(params, dec_inputs, dec_self_attn_mask)
    jax.block_until_ready(out_bf16)
    assert out_bf16.shape == (B, T, d_model), out_bf16.shape
    err_bf16 = float(jnp.max(jnp.abs(out_bf16 - ref)))
    assert jnp.allclose(out_bf16, ref, atol=3e-2, rtol=3e-2), err_bf16

    # Full-f32 path bit-tracks the reference more tightly.
    out_f32 = decoder_layer_forward(params, dec_inputs, dec_self_attn_mask,
                                    use_bf16_matmul=False)
    jax.block_until_ready(out_f32)
    err_f32 = float(jnp.max(jnp.abs(out_f32 - ref)))
    assert jnp.allclose(out_f32, ref, atol=2e-2, rtol=2e-2), err_f32

    print("KERNEL_OK")
</pallas_src>

<mosaic_0001>
module attributes {stable_mosaic.version = 11 : i64} {
  func.func @_decoder_layer_kernel(%arg0: i32, %arg1: i32, %arg2: memref<1x16x128xf32, #tpu.memory_space<vmem>>, %arg3: memref<1x16x16xi8, #tpu.memory_space<vmem>>, %arg4: memref<128x384xbf16, #tpu.memory_space<vmem>>, %arg5: memref<128x128xbf16, #tpu.memory_space<vmem>>, %arg6: memref<1x128xf32, #tpu.memory_space<vmem>>, %arg7: memref<1x128xf32, #tpu.memory_space<vmem>>, %arg8: memref<128x256xbf16, #tpu.memory_space<vmem>>, %arg9: memref<256x128xbf16, #tpu.memory_space<vmem>>, %arg10: memref<1x128xf32, #tpu.memory_space<vmem>>, %arg11: memref<1x128xf32, #tpu.memory_space<vmem>>, %arg12: memref<1x16x128xf32, #tpu.memory_space<vmem>>, %arg13: memref<16x256xbf16, #tpu.memory_space<vmem>>) attributes {dimension_semantics = [#tpu.dimension_semantics<parallel>, #tpu.dimension_semantics<arbitrary>], iteration_bounds = array<i64: 2, 1>, scalar_prefetch = 0 : i64, scratch_operands = 1 : i64, tpu.core_type = #tpu.core_type<tc>, window_params = [{transform_indices = @transform_0, window_bounds = array<i64: 1, 16, 128>}, {transform_indices = @transform_1, window_bounds = array<i64: 1, 16, 16>}, {pipeline_mode = #tpu.pipeline_mode<synchronous>, transform_indices = @transform_2, window_bounds = array<i64: 128, 384>}, {pipeline_mode = #tpu.pipeline_mode<synchronous>, transform_indices = @transform_3, window_bounds = array<i64: 128, 128>}, {pipeline_mode = #tpu.pipeline_mode<synchronous>, transform_indices = @transform_4, window_bounds = array<i64: 1, 128>}, {pipeline_mode = #tpu.pipeline_mode<synchronous>, transform_indices = @transform_5, window_bounds = array<i64: 1, 128>}, {pipeline_mode = #tpu.pipeline_mode<synchronous>, transform_indices = @transform_6, window_bounds = array<i64: 128, 256>}, {pipeline_mode = #tpu.pipeline_mode<synchronous>, transform_indices = @transform_7, window_bounds = array<i64: 256, 128>}, {pipeline_mode = #tpu.pipeline_mode<synchronous>, transform_indices = @transform_8, window_bounds = array<i64: 1, 128>}, {pipeline_mode = #tpu.pipeline_mode<synchronous>, transform_indices = @transform_9, window_bounds = array<i64: 1, 128>}, {transform_indices = @transform_10, window_bounds = array<i64: 1, 16, 128>}]} {
    %c0_i32 = arith.constant 0 : i32
    %0 = arith.cmpi eq, %arg1, %c0_i32 : i32
    %1 = arith.extui %0 : i1 to i32
    %c0_i32_0 = arith.constant 0 : i32
    %2 = arith.cmpi ne, %1, %c0_i32_0 : i32
    scf.if %2 {
      %c0_68 = arith.constant 0 : index
      %c0_69 = arith.constant 0 : index
      %c0_70 = arith.constant 0 : index
      %168 = vector.load %arg2[%c0_68, %c0_69, %c0_70] : memref<1x16x128xf32, #tpu.memory_space<vmem>>, vector<1x16x128xf32>
      %169 = vector.shape_cast %168 : vector<1x16x128xf32> to vector<16x128xf32>
      %170 = arith.truncf %169 : vector<16x128xf32> to vector<16x128xbf16>
      %c0_71 = arith.constant 0 : index
      %c128_72 = arith.constant 128 : index
      %171 = vector.load %arg4[%c0_71, %c128_72] : memref<128x384xbf16, #tpu.memory_space<vmem>>, vector<128x256xbf16>
      %cst_73 = arith.constant dense<0.000000e+00> : vector<16x256xf32>
      %172 = tpu.matmul %170, %171, %cst_73 {dimension_numbers = #tpu.dot_dimension_numbers<[1], [0], [0], [1], [0, 0, 1, 1], [], []>} : vector<16x128xbf16>, vector<128x256xbf16>, vector<16x256xf32> -> vector<16x256xf32>
      %173 = arith.truncf %172 : vector<16x256xf32> to vector<16x256xbf16>
      %c0_74 = arith.constant 0 : index
      %c0_75 = arith.constant 0 : index
      %174 = vector.load %arg13[%c0_74, %c0_75] : memref<16x256xbf16, #tpu.memory_space<vmem>>, vector<16x256xbf16>
      tpu.vector_store %arg13[%c0_74, %c0_75], %173 {strides = array<i32>} : memref<16x256xbf16, #tpu.memory_space<vmem>>, vector<16x256xbf16>,
    } else {
    }
    %c16_i32 = arith.constant 16 : i32
    %3 = arith.muli %arg1, %c16_i32 : i32
    %4 = tpu.assume_multiple %3, 16 : i32
    %c0 = arith.constant 0 : index
    %5 = arith.index_cast %4 : i32 to index
    %c0_1 = arith.constant 0 : index
    %6 = vector.load %arg2[%c0, %5, %c0_1] : memref<1x16x128xf32, #tpu.memory_space<vmem>>, vector<1x16x128xf32>
    %7 = vector.shape_cast %6 : vector<1x16x128xf32> to vector<16x128xf32>
    %8 = arith.truncf %7 : vector<16x128xf32> to vector<16x128xbf16>
    %c0_2 = arith.constant 0 : index
    %c0_3 = arith.constant 0 : index
    %9 = vector.load %arg4[%c0_2, %c0_3] : memref<128x384xbf16, #tpu.memory_space<vmem>>, vector<128x128xbf16>
    %cst = arith.constant dense<0.000000e+00> : vector<16x128xf32>
    %10 = tpu.matmul %8, %9, %cst {dimension_numbers = #tpu.dot_dimension_numbers<[1], [0], [0], [1], [0, 0, 1, 1], [], []>} : vector<16x128xbf16>, vector<128x128xbf16>, vector<16x128xf32> -> vector<16x128xf32>
    %c0_4 = arith.constant 0 : index
    %c0_5 = arith.constant 0 : index
    %11 = vector.load %arg13[%c0_4, %c0_5] : memref<16x256xbf16, #tpu.memory_space<vmem>>, vector<16x128xbf16>
    %c0_6 = arith.constant 0 : index
    %c128 = arith.constant 128 : index
    %12 = vector.load %arg13[%c0_6, %c128] : memref<16x256xbf16, #tpu.memory_space<vmem>>, vector<16x128xbf16>
    %c0_7 = arith.constant 0 : index
    %c0_8 = arith.constant 0 : index
    %c0_9 = arith.constant 0 : index
    %13 = vector.load %arg3[%c0_7, %c0_8, %c0_9] : memref<1x16x16xi8, #tpu.memory_space<vmem>>, vector<1x16x16xi8>
    %14 = vector.shape_cast %13 : vector<1x16x16xi8> to vector<16x16xi8>
    %15 = vector.extract_strided_slice %10 {offsets = [0, 0], sizes = [16, 32], strides = [1, 1]} : vector<16x128xf32> to vector<16x32xf32>
    %16 = arith.truncf %15 : vector<16x32xf32> to vector<16x32xbf16>
    %17 = vector.extract_strided_slice %11 {offsets = [0, 0], sizes = [16, 32], strides = [1, 1]} : vector<16x128xbf16> to vector<16x32xbf16>
    %18 = vector.extract_strided_slice %12 {offsets = [0, 0], sizes = [16, 32], strides = [1, 1]} : vector<16x128xbf16> to vector<16x32xbf16>
    %cst_10 = arith.constant dense<0.000000e+00> : vector<16x16xf32>
    %19 = tpu.matmul %16, %17, %cst_10 {dimension_numbers = #tpu.dot_dimension_numbers<[1], [1], [0], [0], [0, 0, 1, 0], [], []>} : vector<16x32xbf16>, vector<16x32xbf16>, vector<16x16xf32> -> vector<16x16xf32>
    %cst_11 = arith.constant 0.176776692 : f32
    %20 = vector.broadcast %cst_11 : f32 to vector<16x16xf32>
    %21 = arith.mulf %19, %20 : vector<16x16xf32>
    %c0_i8 = arith.constant 0 : i8
    %22 = vector.broadcast %c0_i8 : i8 to vector<16x16xi8>
    %23 = arith.cmpi ne, %14, %22 : vector<16x16xi8>
    %cst_12 = arith.constant -1.000000e+09 : f32
    %24 = vector.broadcast %cst_12 : f32 to vector<16x16xf32>
    %25 = arith.select %23, %24, %21 : vector<16x16xi1>, vector<16x16xf32>
    %cst_13 = arith.constant dense<0xFF800000> : vector<16xf32>
    %26 = vector.multi_reduction <maximumf>, %25, %cst_13 [1] : vector<16x16xf32> to vector<16xf32>
    %27 = vector.shape_cast %26 : vector<16xf32> to vector<16x1xf32>
    %28 = vector.broadcast %27 : vector<16x1xf32> to vector<16x16xf32>
    %29 = arith.subf %25, %28 : vector<16x16xf32>
    %30 = math.exp %29 : vector<16x16xf32>
    %cst_14 = arith.constant dense<0.000000e+00> : vector<16xf32>
    %31 = vector.multi_reduction <add>, %30, %cst_14 [1] : vector<16x16xf32> to vector<16xf32>
    %32 = vector.shape_cast %31 : vector<16xf32> to vector<16x1xf32>
    %33 = tpu.reciprocal %32 {approx = true} : vector<16x1xf32> -> vector<16x1xf32>
    %34 = vector.broadcast %33 : vector<16x1xf32> to vector<16x16xf32>
    %35 = arith.mulf %30, %34 : vector<16x16xf32>
    %36 = arith.truncf %35 : vector<16x16xf32> to vector<16x16xbf16>
    %cst_15 = arith.constant dense<0.000000e+00> : vector<16x32xf32>
    %37 = tpu.matmul %36, %18, %cst_15 {dimension_numbers = #tpu.dot_dimension_numbers<[1], [0], [0], [1], [0, 0, 1, 1], [], []>} : vector<16x16xbf16>, vector<16x32xbf16>, vector<16x32xf32> -> vector<16x32xf32>
    %38 = vector.extract_strided_slice %10 {offsets = [0, 32], sizes = [16, 32], strides = [1, 1]} : vector<16x128xf32> to vector<16x32xf32>
    %39 = arith.truncf %38 : vector<16x32xf32> to vector<16x32xbf16>
    %40 = vector.extract_strided_slice %11 {offsets = [0, 32], sizes = [16, 32], strides = [1, 1]} : vector<16x128xbf16> to vector<16x32xbf16>
    %41 = vector.extract_strided_slice %12 {offsets = [0, 32], sizes = [16, 32], strides = [1, 1]} : vector<16x128xbf16> to vector<16x32xbf16>
    %cst_16 = arith.constant dense<0.000000e+00> : vector<16x16xf32>
    %42 = tpu.matmul %39, %40, %cst_16 {dimension_numbers = #tpu.dot_dimension_numbers<[1], [1], [0], [0], [0, 0, 1, 0], [], []>} : vector<16x32xbf16>, vector<16x32xbf16>, vector<16x16xf32> -> vector<16x16xf32>
    %cst_17 = arith.constant 0.176776692 : f32
    %43 = vector.broadcast %cst_17 : f32 to vector<16x16xf32>
    %44 = arith.mulf %42, %43 : vector<16x16xf32>
    %c0_i8_18 = arith.constant 0 : i8
    %45 = vector.broadcast %c0_i8_18 : i8 to vector<16x16xi8>
    %46 = arith.cmpi ne, %14, %45 : vector<16x16xi8>
    %cst_19 = arith.constant -1.000000e+09 : f32
    %47 = vector.broadcast %cst_19 : f32 to vector<16x16xf32>
    %48 = arith.select %46, %47, %44 : vector<16x16xi1>, vector<16x16xf32>
    %cst_20 = arith.constant dense<0xFF800000> : vector<16xf32>
    %49 = vector.multi_reduction <maximumf>, %48, %cst_20 [1] : vector<16x16xf32> to vector<16xf32>
    %50 = vector.shape_cast %49 : vector<16xf32> to vector<16x1xf32>
    %51 = vector.broadcast %50 : vector<16x1xf32> to vector<16x16xf32>
    %52 = arith.subf %48, %51 : vector<16x16xf32>
    %53 = math.exp %52 : vector<16x16xf32>
    %cst_21 = arith.constant dense<0.000000e+00> : vector<16xf32>
    %54 = vector.multi_reduction <add>, %53, %cst_21 [1] : vector<16x16xf32> to vector<16xf32>
    %55 = vector.shape_cast %54 : vector<16xf32> to vector<16x1xf32>
    %56 = tpu.reciprocal %55 {approx = true} : vector<16x1xf32> -> vector<16x1xf32>
    %57 = vector.broadcast %56 : vector<16x1xf32> to vector<16x16xf32>
    %58 = arith.mulf %53, %57 : vector<16x16xf32>
    %59 = arith.truncf %58 : vector<16x16xf32> to vector<16x16xbf16>
    %cst_22 = arith.constant dense<0.000000e+00> : vector<16x32xf32>
    %60 = tpu.matmul %59, %41, %cst_22 {dimension_numbers = #tpu.dot_dimension_numbers<[1], [0], [0], [1], [0, 0, 1, 1], [], []>} : vector<16x16xbf16>, vector<16x32xbf16>, vector<16x32xf32> -> vector<16x32xf32>
    %61 = vector.extract_strided_slice %10 {offsets = [0, 64], sizes = [16, 32], strides = [1, 1]} : vector<16x128xf32> to vector<16x32xf32>
    %62 = arith.truncf %61 : vector<16x32xf32> to vector<16x32xbf16>
    %63 = vector.extract_strided_slice %11 {offsets = [0, 64], sizes = [16, 32], strides = [1, 1]} : vector<16x128xbf16> to vector<16x32xbf16>
    %64 = vector.extract_strided_slice %12 {offsets = [0, 64], sizes = [16, 32], strides = [1, 1]} : vector<16x128xbf16> to vector<16x32xbf16>
    %cst_23 = arith.constant dense<0.000000e+00> : vector<16x16xf32>
    %65 = tpu.matmul %62, %63, %cst_23 {dimension_numbers = #tpu.dot_dimension_numbers<[1], [1], [0], [0], [0, 0, 1, 0], [], []>} : vector<16x32xbf16>, vector<16x32xbf16>, vector<16x16xf32> -> vector<16x16xf32>
    %cst_24 = arith.constant 0.176776692 : f32
    %66 = vector.broadcast %cst_24 : f32 to vector<16x16xf32>
    %67 = arith.mulf %65, %66 : vector<16x16xf32>
    %c0_i8_25 = arith.constant 0 : i8
    %68 = vector.broadcast %c0_i8_25 : i8 to vector<16x16xi8>
    %69 = arith.cmpi ne, %14, %68 : vector<16x16xi8>
    %cst_26 = arith.constant -1.000000e+09 : f32
    %70 = vector.broadcast %cst_26 : f32 to vector<16x16xf32>
    %71 = arith.select %69, %70, %67 : vector<16x16xi1>, vector<16x16xf32>
    %cst_27 = arith.constant dense<0xFF800000> : vector<16xf32>
    %72 = vector.multi_reduction <maximumf>, %71, %cst_27 [1] : vector<16x16xf32> to vector<16xf32>
    %73 = vector.shape_cast %72 : vector<16xf32> to vector<16x1xf32>
    %74 = vector.broadcast %73 : vector<16x1xf32> to vector<16x16xf32>
    %75 = arith.subf %71, %74 : vector<16x16xf32>
    %76 = math.exp %75 : vector<16x16xf32>
    %cst_28 = arith.constant dense<0.000000e+00> : vector<16xf32>
    %77 = vector.multi_reduction <add>, %76, %cst_28 [1] : vector<16x16xf32> to vector<16xf32>
    %78 = vector.shape_cast %77 : vector<16xf32> to vector<16x1xf32>
    %79 = tpu.reciprocal %78 {approx = true} : vector<16x1xf32> -> vector<16x1xf32>
    %80 = vector.broadcast %79 : vector<16x1xf32> to vector<16x16xf32>
    %81 = arith.mulf %76, %80 : vector<16x16xf32>
    %82 = arith.truncf %81 : vector<16x16xf32> to vector<16x16xbf16>
    %cst_29 = arith.constant dense<0.000000e+00> : vector<16x32xf32>
    %83 = tpu.matmul %82, %64, %cst_29 {dimension_numbers = #tpu.dot_dimension_numbers<[1], [0], [0], [1], [0, 0, 1, 1], [], []>} : vector<16x16xbf16>, vector<16x32xbf16>, vector<16x32xf32> -> vector<16x32xf32>
    %84 = vector.extract_strided_slice %10 {offsets = [0, 96], sizes = [16, 32], strides = [1, 1]} : vector<16x128xf32> to vector<16x32xf32>
    %85 = arith.truncf %84 : vector<16x32xf32> to vector<16x32xbf16>
    %86 = vector.extract_strided_slice %11 {offsets = [0, 96], sizes = [16, 32], strides = [1, 1]} : vector<16x128xbf16> to vector<16x32xbf16>
    %87 = vector.extract_strided_slice %12 {offsets = [0, 96], sizes = [16, 32], strides = [1, 1]} : vector<16x128xbf16> to vector<16x32xbf16>
    %cst_30 = arith.constant dense<0.000000e+00> : vector<16x16xf32>
    %88 = tpu.matmul %85, %86, %cst_30 {dimension_numbers = #tpu.dot_dimension_numbers<[1], [1], [0], [0], [0, 0, 1, 0], [], []>} : vector<16x32xbf16>, vector<16x32xbf16>, vector<16x16xf32> -> vector<16x16xf32>
    %cst_31 = arith.constant 0.176776692 : f32
    %89 = vector.broadcast %cst_31 : f32 to vector<16x16xf32>
    %90 = arith.mulf %88, %89 : vector<16x16xf32>
    %c0_i8_32 = arith.constant 0 : i8
    %91 = vector.broadcast %c0_i8_32 : i8 to vector<16x16xi8>
    %92 = arith.cmpi ne, %14, %91 : vector<16x16xi8>
    %cst_33 = arith.constant -1.000000e+09 : f32
    %93 = vector.broadcast %cst_33 : f32 to vector<16x16xf32>
    %94 = arith.select %92, %93, %90 : vector<16x16xi1>, vector<16x16xf32>
    %cst_34 = arith.constant dense<0xFF800000> : vector<16xf32>
    %95 = vector.multi_reduction <maximumf>, %94, %cst_34 [1] : vector<16x16xf32> to vector<16xf32>
    %96 = vector.shape_cast %95 : vector<16xf32> to vector<16x1xf32>
    %97 = vector.broadcast %96 : vector<16x1xf32> to vector<16x16xf32>
    %98 = arith.subf %94, %97 : vector<16x16xf32>
    %99 = math.exp %98 : vector<16x16xf32>
    %cst_35 = arith.constant dense<0.000000e+00> : vector<16xf32>
    %100 = vector.multi_reduction <add>, %99, %cst_35 [1] : vector<16x16xf32> to vector<16xf32>
    %101 = vector.shape_cast %100 : vector<16xf32> to vector<16x1xf32>
    %102 = tpu.reciprocal %101 {approx = true} : vector<16x1xf32> -> vector<16x1xf32>
    %103 = vector.broadcast %102 : vector<16x1xf32> to vector<16x16xf32>
    %104 = arith.mulf %99, %103 : vector<16x16xf32>
    %105 = arith.truncf %104 : vector<16x16xf32> to vector<16x16xbf16>
    %cst_36 = arith.constant dense<0.000000e+00> : vector<16x32xf32>
    %106 = tpu.matmul %105, %87, %cst_36 {dimension_numbers = #tpu.dot_dimension_numbers<[1], [0], [0], [1], [0, 0, 1, 1], [], []>} : vector<16x16xbf16>, vector<16x32xbf16>, vector<16x32xf32> -> vector<16x32xf32>
    %107 = tpu.concatenate %37, %60, %83, %106 in 1 : vector<16x32xf32>, vector<16x32xf32>, vector<16x32xf32>, vector<16x32xf32> -> vector<16x128xf32>
    %108 = arith.truncf %107 : vector<16x128xf32> to vector<16x128xbf16>
    %c0_37 = arith.constant 0 : index
    %c0_38 = arith.constant 0 : index
    %109 = vector.load %arg5[%c0_37, %c0_38] : memref<128x128xbf16, #tpu.memory_space<vmem>>, vector<128x128xbf16>
    %cst_39 = arith.constant dense<0.000000e+00> : vector<16x128xf32>
    %110 = tpu.matmul %108, %109, %cst_39 {dimension_numbers = #tpu.dot_dimension_numbers<[1], [0], [0], [1], [0, 0, 1, 1], [], []>} : vector<16x128xbf16>, vector<128x128xbf16>, vector<16x128xf32> -> vector<16x128xf32>
    %111 = arith.addf %110, %7 : vector<16x128xf32>
    %c0_40 = arith.constant 0 : index
    %c0_41 = arith.constant 0 : index
    %112 = vector.load %arg6[%c0_40, %c0_41] : memref<1x128xf32, #tpu.memory_space<vmem>>, vector<1x128xf32>
    %c0_42 = arith.constant 0 : index
    %c0_43 = arith.constant 0 : index
    %113 = vector.load %arg7[%c0_42, %c0_43] : memref<1x128xf32, #tpu.memory_space<vmem>>, vector<1x128xf32>
    %cst_44 = arith.constant dense<0.000000e+00> : vector<16xf32>
    %114 = vector.multi_reduction <add>, %111, %cst_44 [1] : vector<16x128xf32> to vector<16xf32>
    %115 = vector.shape_cast %114 : vector<16xf32> to vector<16x1xf32>
    %cst_45 = arith.constant 1.280000e+02 : f32
    %116 = vector.broadcast %cst_45 : f32 to vector<16x1xf32>
    %117 = arith.divf %115, %116 : vector<16x1xf32>
    %118 = vector.broadcast %117 : vector<16x1xf32> to vector<16x128xf32>
    %119 = arith.subf %111, %118 : vector<16x128xf32>
    %120 = arith.mulf %119, %119 : vector<16x128xf32>
    %cst_46 = arith.constant dense<0.000000e+00> : vector<16xf32>
    %121 = vector.multi_reduction <add>, %120, %cst_46 [1] : vector<16x128xf32> to vector<16xf32>
    %122 = vector.shape_cast %121 : vector<16xf32> to vector<16x1xf32>
    %cst_47 = arith.constant 1.280000e+02 : f32
    %123 = vector.broadcast %cst_47 : f32 to vector<16x1xf32>
    %124 = arith.divf %122, %123 : vector<16x1xf32>
    %cst_48 = arith.constant 9.99999974E-6 : f32
    %125 = vector.broadcast %cst_48 : f32 to vector<16x1xf32>
    %126 = arith.addf %124, %125 : vector<16x1xf32>
    %127 = math.rsqrt %126 : vector<16x1xf32>
    %128 = vector.broadcast %127 : vector<16x1xf32> to vector<16x128xf32>
    %129 = arith.mulf %119, %128 : vector<16x128xf32>
    %130 = vector.broadcast %112 : vector<1x128xf32> to vector<16x128xf32>
    %131 = arith.mulf %129, %130 : vector<16x128xf32>
    %132 = vector.broadcast %113 : vector<1x128xf32> to vector<16x128xf32>
    %133 = arith.addf %131, %132 : vector<16x128xf32>
    %134 = arith.truncf %133 : vector<16x128xf32> to vector<16x128xbf16>
    %c0_49 = arith.constant 0 : index
    %c0_50 = arith.constant 0 : index
    %135 = vector.load %arg8[%c0_49, %c0_50] : memref<128x256xbf16, #tpu.memory_space<vmem>>, vector<128x256xbf16>
    %cst_51 = arith.constant dense<0.000000e+00> : vector<16x256xf32>
    %136 = tpu.matmul %134, %135, %cst_51 {dimension_numbers = #tpu.dot_dimension_numbers<[1], [0], [0], [1], [0, 0, 1, 1], [], []>} : vector<16x128xbf16>, vector<128x256xbf16>, vector<16x256xf32> -> vector<16x256xf32>
    %cst_52 = arith.constant 0.000000e+00 : f32
    %137 = vector.broadcast %cst_52 : f32 to vector<16x256xf32>
    %138 = arith.maximumf %136, %137 : vector<16x256xf32>
    %139 = arith.truncf %138 : vector<16x256xf32> to vector<16x256xbf16>
    %c0_53 = arith.constant 0 : index
    %c0_54 = arith.constant 0 : index
    %140 = vector.load %arg9[%c0_53, %c0_54] : memref<256x128xbf16, #tpu.memory_space<vmem>>, vector<256x128xbf16>
    %cst_55 = arith.constant dense<0.000000e+00> : vector<16x128xf32>
    %141 = tpu.matmul %139, %140, %cst_55 {dimension_numbers = #tpu.dot_dimension_numbers<[1], [0], [0], [1], [0, 0, 1, 1], [], []>} : vector<16x256xbf16>, vector<256x128xbf16>, vector<16x128xf32> -> vector<16x128xf32>
    %142 = arith.addf %141, %133 : vector<16x128xf32>
    %c0_56 = arith.constant 0 : index
    %c0_57 = arith.constant 0 : index
    %143 = vector.load %arg10[%c0_56, %c0_57] : memref<1x128xf32, #tpu.memory_space<vmem>>, vector<1x128xf32>
    %c0_58 = arith.constant 0 : index
    %c0_59 = arith.constant 0 : index
    %144 = vector.load %arg11[%c0_58, %c0_59] : memref<1x128xf32, #tpu.memory_space<vmem>>, vector<1x128xf32>
    %cst_60 = arith.constant dense<0.000000e+00> : vector<16xf32>
    %145 = vector.multi_reduction <add>, %142, %cst_60 [1] : vector<16x128xf32> to vector<16xf32>
    %146 = vector.shape_cast %145 : vector<16xf32> to vector<16x1xf32>
    %cst_61 = arith.constant 1.280000e+02 : f32
    %147 = vector.broadcast %cst_61 : f32 to vector<16x1xf32>
    %148 = arith.divf %146, %147 : vector<16x1xf32>
    %149 = vector.broadcast %148 : vector<16x1xf32> to vector<16x128xf32>
    %150 = arith.subf %142, %149 : vector<16x128xf32>
    %151 = arith.mulf %150, %150 : vector<16x128xf32>
    %cst_62 = arith.constant dense<0.000000e+00> : vector<16xf32>
    %152 = vector.multi_reduction <add>, %151, %cst_62 [1] : vector<16x128xf32> to vector<16xf32>
    %153 = vector.shape_cast %152 : vector<16xf32> to vector<16x1xf32>
    %cst_63 = arith.constant 1.280000e+02 : f32
    %154 = vector.broadcast %cst_63 : f32 to vector<16x1xf32>
    %155 = arith.divf %153, %154 : vector<16x1xf32>
    %cst_64 = arith.constant 9.99999974E-6 : f32
    %156 = vector.broadcast %cst_64 : f32 to vector<16x1xf32>
    %157 = arith.addf %155, %156 : vector<16x1xf32>
    %158 = math.rsqrt %157 : vector<16x1xf32>
    %159 = vector.broadcast %158 : vector<16x1xf32> to vector<16x128xf32>
    %160 = arith.mulf %150, %159 : vector<16x128xf32>
    %161 = vector.broadcast %143 : vector<1x128xf32> to vector<16x128xf32>
    %162 = arith.mulf %160, %161 : vector<16x128xf32>
    %163 = vector.broadcast %144 : vector<1x128xf32> to vector<16x128xf32>
    %164 = arith.addf %162, %163 : vector<16x128xf32>
    %c0_65 = arith.constant 0 : index
    %c0_66 = arith.constant 0 : index
    %c0_67 = arith.constant 0 : index
    %165 = vector.load %arg12[%c0_65, %c0_66, %c0_67] : memref<1x16x128xf32, #tpu.memory_space<vmem>>, vector<1x16x128xf32>
    %166 = vector.shape_cast %165 : vector<1x16x128xf32> to vector<16x128xf32>
    %167 = vector.shape_cast %164 : vector<16x128xf32> to vector<1x16x128xf32>
    tpu.vector_store %arg12[%c0_65, %c0_66, %c0_67], %167 {strides = array<i32>} : memref<1x16x128xf32, #tpu.memory_space<vmem>>, vector<1x16x128xf32>,
    return
  }
  func.func @transform_0(%arg0: i32, %arg1: i32) -> (i32, i32, i32) {
    %c0_i32 = arith.constant 0 : i32
    %c0_i32_0 = arith.constant 0 : i32
    %c0_i32_1 = arith.constant 0 : i32
    return %arg0, %c0_i32, %c0_i32_0 : i32, i32, i32
  }
  func.func @transform_1(%arg0: i32, %arg1: i32) -> (i32, i32, i32) {
    %c0_i32 = arith.constant 0 : i32
    %c0_i32_0 = arith.constant 0 : i32
    return %arg0, %arg1, %c0_i32 : i32, i32, i32
  }
  func.func @transform_2(%arg0: i32, %arg1: i32) -> (i32, i32) {
    %c0_i32 = arith.constant 0 : i32
    %c0_i32_0 = arith.constant 0 : i32
    %c0_i32_1 = arith.constant 0 : i32
    return %c0_i32, %c0_i32_0 : i32, i32
  }
  func.func @transform_3(%arg0: i32, %arg1: i32) -> (i32, i32) {
    %c0_i32 = arith.constant 0 : i32
    %c0_i32_0 = arith.constant 0 : i32
    %c0_i32_1 = arith.constant 0 : i32
    return %c0_i32, %c0_i32_0 : i32, i32
  }
  func.func @transform_4(%arg0: i32, %arg1: i32) -> (i32, i32) {
    %c0_i32 = arith.constant 0 : i32
    %c0_i32_0 = arith.constant 0 : i32
    %c0_i32_1 = arith.constant 0 : i32
    return %c0_i32, %c0_i32_0 : i32, i32
  }
  func.func @transform_5(%arg0: i32, %arg1: i32) -> (i32, i32) {
    %c0_i32 = arith.constant 0 : i32
    %c0_i32_0 = arith.constant 0 : i32
    %c0_i32_1 = arith.constant 0 : i32
    return %c0_i32, %c0_i32_0 : i32, i32
  }
  func.func @transform_6(%arg0: i32, %arg1: i32) -> (i32, i32) {
    %c0_i32 = arith.constant 0 : i32
    %c0_i32_0 = arith.constant 0 : i32
    %c0_i32_1 = arith.constant 0 : i32
    return %c0_i32, %c0_i32_0 : i32, i32
  }
  func.func @transform_7(%arg0: i32, %arg1: i32) -> (i32, i32) {
    %c0_i32 = arith.constant 0 : i32
    %c0_i32_0 = arith.constant 0 : i32
    %c0_i32_1 = arith.constant 0 : i32
    return %c0_i32, %c0_i32_0 : i32, i32
  }
  func.func @transform_8(%arg0: i32, %arg1: i32) -> (i32, i32) {
    %c0_i32 = arith.constant 0 : i32
    %c0_i32_0 = arith.constant 0 : i32
    %c0_i32_1 = arith.constant 0 : i32
    return %c0_i32, %c0_i32_0 : i32, i32
  }
  func.func @transform_9(%arg0: i32, %arg1: i32) -> (i32, i32) {
    %c0_i32 = arith.constant 0 : i32
    %c0_i32_0 = arith.constant 0 : i32
    %c0_i32_1 = arith.constant 0 : i32
    return %c0_i32, %c0_i32_0 : i32, i32
  }
  func.func @transform_10(%arg0: i32, %arg1: i32) -> (i32, i32, i32) {
    %c0_i32 = arith.constant 0 : i32
    %c0_i32_0 = arith.constant 0 : i32
    return %arg0, %arg1, %c0_i32 : i32, i32, i32
  }
}

</mosaic_0001>

<llo_original>
// kernel: decoder_layer_forward.1
$region0: #{decoder_layer_forward.1}
  #allocation0 [shape = 'u32[]', space=smem, size = 0x4, offset = 0x4, fixed_abs, tag = 'smem constant byte address 0x4 - core index']
  #allocation1 [shape = 'u32[144,128]{1,0:T(1,128)}', space=vmem, size = 0x12000, scoped, tag = 'internal scratch']
  #allocation2 [shape = 'bf16[16,256]{1,0:T(16,128)(2,1)}', space=vmem, size = 0x2000, scoped, tag = 'scratch operand']
  %s0 = inlined_call_operand.vmem [shape: f32[2,16,128], index: 0, kind: input, shape index: {}]
  %s1 = inlined_call_operand.vmem [shape: s8[2,16,16], index: 1, kind: input, shape index: {}]
  %s2 = inlined_call_operand.vmem [shape: bf16[128,384], index: 2, kind: input, shape index: {}]
  %s3 = inlined_call_operand.vmem [shape: bf16[128,128], index: 3, kind: input, shape index: {}]
  %s4 = inlined_call_operand.vmem [shape: f32[1,128], index: 4, kind: input, shape index: {}]
  %s5 = inlined_call_operand.vmem [shape: f32[1,128], index: 5, kind: input, shape index: {}]
  %s6 = inlined_call_operand.vmem [shape: bf16[128,256], index: 6, kind: input, shape index: {}]
  %s7 = inlined_call_operand.vmem [shape: bf16[256,128], index: 7, kind: input, shape index: {}]
  %s8 = inlined_call_operand.vmem [shape: f32[1,128], index: 8, kind: input, shape index: {}]
  %s9 = inlined_call_operand.vmem [shape: f32[1,128], index: 9, kind: input, shape index: {}]
  %s10 = inlined_call_operand.hbm [shape: f32[2,16,128], index: 10, kind: output, shape index: {}]
  %s11 = sld [smem:[#allocation0]]
  $region77: #{decoder_layer_forward.1} parent=0
    _
  %s13 = ssub.s32 1, %s11
  %s14 = scalar_select 0, %s13, %s11
  $region1: #{decoder_layer_forward.1} parent=0
    #allocation3 [shape = 'u8[16384]{0}', space=vmem, size = 0x4000, scoped, tag = 'output window, operand 0']
    #allocation4 [shape = 's32[2]{0}', space=sflag, size = 0x8, scoped, tag = 'scoped memory for decoder_layer_forward.1']
    %15 = vsyncpa [#allocation4], 0
    %s16 = scalar_lea.sflag [#allocation4], 1
    %17 = vsyncpa %s16, 0
    loop: start=0, step=1, limit=4
    $region2: #{decoder_layer_forward.1} parent=1 // loop_pre_header
      _
    $region3: #{decoder_layer_forward.1} parent=1 // loop_header
      %s19 = sphi 0, %s23
      %p20 = scmp.ge.s32.totalorder %s19, 4
      %s26 = sphi 0, %s38
      %s27 = sphi 0, %s34
      %s28 = sphi 0, %s26
      %s29 = sphi 0, %s27
      %s30 = sphi 0, %s28
      %s31 = sphi 0, %s29
      %s41 = sphi 0, %s43
      %s44 = sphi 0, %s41
      %s45 = sphi 0, %s44
      %s61 = sphi 0, %s45
      %s69 = sphi 0, %s71
      %s72 = sphi 0, %s69
      %s73 = sphi 0, %s72
      %s89 = sphi 0, %s73
      %s93 = sphi 0, %s93
      %s95 = sphi 0, %s93
      %s96 = sphi 0, %s95
      %s110 = sphi 0, %s96
      %s114 = sphi 0, %s114
      %s116 = sphi 0, %s114
      %s117 = sphi 0, %s116
      %s131 = sphi 0, %s117
      %s135 = sphi 0, %s135
      %s137 = sphi 0, %s135
      %s138 = sphi 0, %s137
      %s152 = sphi 0, %s138
      %s156 = sphi 0, %s156
      %s158 = sphi 0, %s156
      %s159 = sphi 0, %s158
      %s173 = sphi 0, %s159
      %s177 = sphi 0, %s177
      %s179 = sphi 0, %s177
      %s180 = sphi 0, %s179
      %s194 = sphi 0, %s180
      %s198 = sphi 0, %s198
      %s200 = sphi 0, %s198
      %s201 = sphi 0, %s200
      %s215 = sphi 0, %s201
      %s219 = sphi 0, %s219
      %s221 = sphi 0, %s219
      %s222 = sphi 0, %s221
      %s236 = sphi 0, %s222
      %s240 = sphi 0, %s240
      %s242 = sphi 0, %s240
      %s243 = sphi 0, %s242
      %s257 = sphi 0, %s243
      %s265 = sphi 0, %s267
      %s268 = sphi 0, %s265
      %s269 = sphi 0, %s268
      %s285 = sphi 0, %s269
    $region4: #{decoder_layer_forward.1} parent=1 // loop_header_branch
      %22 = sbr.rel (%p20) target = $region8
    $region5: #{decoder_layer_forward.1} parent=1 // loop_body
      %s24 = ssub.s32 %s19, 1
      %s25 = ssub.s32 %s19, 2
      %s32 = sadd.s32 1, %s27
      %p33 = scmp.ge.s32.totalorder %s32, 1
      %s34 = scalar_select %p33, 0, %s32
      %s35 = sadd.s32 1, %s26
      %s36 = scalar_select %p33, %s35, %s26
      %p37 = scmp.ge.s32.totalorder %s36, 2
      %s38 = scalar_select %p37, 0, %s36
      %s39 = ssub.s32 %s26, %s38
      %p40 = scmp.eq.s32.totalorder %s39, 0
      %s42 = sadd.s32 %s41, 1
      %s43 = scalar_select %p40, %s41, %s42
      %p46 = pneg %p40
      %p47 = scmp.eq.s32.totalorder %s19, 1
      %p48 = por %p46, %p47
      %p49 = scmp.ne.s32.totalorder %s41, %s44
      %p50 = scmp.eq.s32.totalorder %s19, 0
      %p51 = por %p49, %p50
      %p52 = scmp.ne.s32.totalorder %s41, %s44
      %p53 = scmp.eq.s32.totalorder %s24, 1
      %p54 = por %p52, %p53
      %p55 = scmp.ne.s32.totalorder %s44, %s45
      %p56 = scmp.eq.s32.totalorder %s24, 0
      %p57 = por %p55, %p56
      %p58 = scmp.ne.s32.totalorder %s44, %s45
      %p59 = scmp.eq.s32.totalorder %s25, 1
      %p60 = por %p58, %p59
      %p62 = scmp.ne.s32.totalorder %s45, %s61
      %p63 = scmp.eq.s32.totalorder %s25, 0
      %p64 = por %p62, %p63
      %s65 = ssub.s32 %s26, %s38
      %s66 = ssub.s32 %s27, %s34
      %s67 = sor.u32 %s65, %s66
      %p68 = scmp.eq.s32.totalorder %s67, 0
      %s70 = sadd.s32 %s69, 1
      %s71 = scalar_select %p68, %s69, %s70
      %p74 = pneg %p68
      %p75 = scmp.eq.s32.totalorder %s19, 1
      %p76 = por %p74, %p75
      %p77 = scmp.ne.s32.totalorder %s69, %s72
      %p78 = scmp.eq.s32.totalorder %s19, 0
      %p79 = por %p77, %p78
      %p80 = scmp.ne.s32.totalorder %s69, %s72
      %p81 = scmp.eq.s32.totalorder %s24, 1
      %p82 = por %p80, %p81
      %p83 = scmp.ne.s32.totalorder %s72, %s73
      %p84 = scmp.eq.s32.totalorder %s24, 0
      %p85 = por %p83, %p84
      %p86 = scmp.ne.s32.totalorder %s72, %s73
      %p87 = scmp.eq.s32.totalorder %s25, 1
      %p88 = por %p86, %p87
      %p90 = scmp.ne.s32.totalorder %s73, %s89
      %p91 = scmp.eq.s32.totalorder %s25, 0
      %p92 = por %p90, %p91
      %s94 = sadd.s32 %s93, 1
      %p97 = scmp.eq.s32.totalorder %s19, 1
      %p98 = scmp.ne.s32.totalorder %s93, %s95
      %p99 = scmp.eq.s32.totalorder %s19, 0
      %p100 = por %p98, %p99
      %p101 = scmp.ne.s32.totalorder %s93, %s95
      %p102 = scmp.eq.s32.totalorder %s24, 1
      %p103 = por %p101, %p102
      %p104 = scmp.ne.s32.totalorder %s95, %s96
      %p105 = scmp.eq.s32.totalorder %s24, 0
      %p106 = por %p104, %p105
      %p107 = scmp.ne.s32.totalorder %s95, %s96
      %p108 = scmp.eq.s32.totalorder %s25, 1
      %p109 = por %p107, %p108
      %p111 = scmp.ne.s32.totalorder %s96, %s110
      %p112 = scmp.eq.s32.totalorder %s25, 0
      %p113 = por %p111, %p112
      %s115 = sadd.s32 %s114, 1
      %p118 = scmp.eq.s32.totalorder %s19, 1
      %p119 = scmp.ne.s32.totalorder %s114, %s116
      %p120 = scmp.eq.s32.totalorder %s19, 0
      %p121 = por %p119, %p120
      %p122 = scmp.ne.s32.totalorder %s114, %s116
      %p123 = scmp.eq.s32.totalorder %s24, 1
      %p124 = por %p122, %p123
      %p125 = scmp.ne.s32.totalorder %s116, %s117
      %p126 = scmp.eq.s32.totalorder %s24, 0
      %p127 = por %p125, %p126
      %p128 = scmp.ne.s32.totalorder %s116, %s117
      %p129 = scmp.eq.s32.totalorder %s25, 1
      %p130 = por %p128, %p129
      %p132 = scmp.ne.s32.totalorder %s117, %s131
      %p133 = scmp.eq.s32.totalorder %s25, 0
      %p134 = por %p132, %p133
      %s136 = sadd.s32 %s135, 1
      %p139 = scmp.eq.s32.totalorder %s19, 1
      %p140 = scmp.ne.s32.totalorder %s135, %s137
      %p141 = scmp.eq.s32.totalorder %s19, 0
      %p142 = por %p140, %p141
      %p143 = scmp.ne.s32.totalorder %s135, %s137
      %p144 = scmp.eq.s32.totalorder %s24, 1
      %p145 = por %p143, %p144
      %p146 = scmp.ne.s32.totalorder %s137, %s138
      %p147 = scmp.eq.s32.totalorder %s24, 0
      %p148 = por %p146, %p147
      %p149 = scmp.ne.s32.totalorder %s137, %s138
      %p150 = scmp.eq.s32.totalorder %s25, 1
      %p151 = por %p149, %p150
      %p153 = scmp.ne.s32.totalorder %s138, %s152
      %p154 = scmp.eq.s32.totalorder %s25, 0
      %p155 = por %p153, %p154
      %s157 = sadd.s32 %s156, 1
      %p160 = scmp.eq.s32.totalorder %s19, 1
      %p161 = scmp.ne.s32.totalorder %s156, %s158
      %p162 = scmp.eq.s32.totalorder %s19, 0
      %p163 = por %p161, %p162
      %p164 = scmp.ne.s32.totalorder %s156, %s158
      %p165 = scmp.eq.s32.totalorder %s24, 1
      %p166 = por %p164, %p165
      %p167 = scmp.ne.s32.totalorder %s158, %s159
      %p168 = scmp.eq.s32.totalorder %s24, 0
      %p169 = por %p167, %p168
      %p170 = scmp.ne.s32.totalorder %s158, %s159
      %p171 = scmp.eq.s32.totalorder %s25, 1
      %p172 = por %p170, %p171
      %p174 = scmp.ne.s32.totalorder %s159, %s173
      %p175 = scmp.eq.s32.totalorder %s25, 0
      %p176 = por %p174, %p175
      %s178 = sadd.s32 %s177, 1
      %p181 = scmp.eq.s32.totalorder %s19, 1
      %p182 = scmp.ne.s32.totalorder %s177, %s179
      %p183 = scmp.eq.s32.totalorder %s19, 0
      %p184 = por %p182, %p183
      %p185 = scmp.ne.s32.totalorder %s177, %s179
      %p186 = scmp.eq.s32.totalorder %s24, 1
      %p187 = por %p185, %p186
      %p188 = scmp.ne.s32.totalorder %s179, %s180
      %p189 = scmp.eq.s32.totalorder %s24, 0
      %p190 = por %p188, %p189
      %p191 = scmp.ne.s32.totalorder %s179, %s180
      %p192 = scmp.eq.s32.totalorder %s25, 1
      %p193 = por %p191, %p192
      %p195 = scmp.ne.s32.totalorder %s180, %s194
      %p196 = scmp.eq.s32.totalorder %s25, 0
      %p197 = por %p195, %p196
      %s199 = sadd.s32 %s198, 1
      %p202 = scmp.eq.s32.totalorder %s19, 1
      %p203 = scmp.ne.s32.totalorder %s198, %s200
      %p204 = scmp.eq.s32.totalorder %s19, 0
      %p205 = por %p203, %p204
      %p206 = scmp.ne.s32.totalorder %s198, %s200
      %p207 = scmp.eq.s32.totalorder %s24, 1
      %p208 = por %p206, %p207
      %p209 = scmp.ne.s32.totalorder %s200, %s201
      %p210 = scmp.eq.s32.totalorder %s24, 0
      %p211 = por %p209, %p210
      %p212 = scmp.ne.s32.totalorder %s200, %s201
      %p213 = scmp.eq.s32.totalorder %s25, 1
      %p214 = por %p212, %p213
      %p216 = scmp.ne.s32.totalorder %s201, %s215
      %p217 = scmp.eq.s32.totalorder %s25, 0
      %p218 = por %p216, %p217
      %s220 = sadd.s32 %s219, 1
      %p223 = scmp.eq.s32.totalorder %s19, 1
      %p224 = scmp.ne.s32.totalorder %s219, %s221
      %p225 = scmp.eq.s32.totalorder %s19, 0
      %p226 = por %p224, %p225
      %p227 = scmp.ne.s32.totalorder %s219, %s221
      %p228 = scmp.eq.s32.totalorder %s24, 1
      %p229 = por %p227, %p228
      %p230 = scmp.ne.s32.totalorder %s221, %s222
      %p231 = scmp.eq.s32.totalorder %s24, 0
      %p232 = por %p230, %p231
      %p233 = scmp.ne.s32.totalorder %s221, %s222
      %p234 = scmp.eq.s32.totalorder %s25, 1
      %p235 = por %p233, %p234
      %p237 = scmp.ne.s32.totalorder %s222, %s236
      %p238 = scmp.eq.s32.totalorder %s25, 0
      %p239 = por %p237, %p238
      %s241 = sadd.s32 %s240, 1
      %p244 = scmp.eq.s32.totalorder %s19, 1
      %p245 = scmp.ne.s32.totalorder %s240, %s242
      %p246 = scmp.eq.s32.totalorder %s19, 0
      %p247 = por %p245, %p246
      %p248 = scmp.ne.s32.totalorder %s240, %s242
      %p249 = scmp.eq.s32.totalorder %s24, 1
      %p250 = por %p248, %p249
      %p251 = scmp.ne.s32.totalorder %s242, %s243
      %p252 = scmp.eq.s32.totalorder %s24, 0
      %p253 = por %p251, %p252
      %p254 = scmp.ne.s32.totalorder %s242, %s243
      %p255 = scmp.eq.s32.totalorder %s25, 1
      %p256 = por %p254, %p255
      %p258 = scmp.ne.s32.totalorder %s243, %s257
      %p259 = scmp.eq.s32.totalorder %s25, 0
      %p260 = por %p258, %p259
      %s261 = ssub.s32 %s26, %s38
      %s262 = ssub.s32 %s27, %s34
      %s263 = sor.u32 %s261, %s262
      %p264 = scmp.eq.s32.totalorder %s263, 0
      %s266 = sadd.s32 %s265, 1
      %s267 = scalar_select %p264, %s265, %s266
      %p270 = pneg %p264
      %p271 = scmp.eq.s32.totalorder %s19, 1
      %p272 = por %p270, %p271
      %p273 = scmp.ne.s32.totalorder %s265, %s268
      %p274 = scmp.eq.s32.totalorder %s19, 0
      %p275 = por %p273, %p274
      %p276 = scmp.ne.s32.totalorder %s265, %s268
      %p277 = scmp.eq.s32.totalorder %s24, 1
      %p278 = por %p276, %p277
      %p279 = scmp.ne.s32.totalorder %s268, %s269
      %p280 = scmp.eq.s32.totalorder %s24, 0
      %p281 = por %p279, %p280
      %p282 = scmp.ne.s32.totalorder %s268, %s269
      %p283 = scmp.eq.s32.totalorder %s25, 1
      %p284 = por %p282, %p283
      %p286 = scmp.ne.s32.totalorder %s269, %s285
      %p287 = scmp.eq.s32.totalorder %s25, 0
      %p288 = por %p286, %p287
      %p289 = scmp.le.s32.totalorder 1, %s19
      %p290 = scmp.lt.s32.totalorder %s19, 3
      %p291 = pnand %p289, %p290
      %p292 = pneg %p291
      // Predicated region
      $region9: #{decoder_layer_forward.1} parent=5 // pred_check
        _
      $region10: #{decoder_layer_forward.1} parent=5 // pred_check_branch
        %294 = sbr.rel (%p291) target = $region12
      $region11: #{decoder_layer_forward.1} parent=5 // pred_region
        %s295 = ssub.s32 %s19, 1
        // Predicated region
        $region13: #{decoder_layer_forward.1} parent=11 // pred_check
          %p296 = pneg %p106
        $region14: #{decoder_layer_forward.1} parent=11 // pred_check_branch
          %298 = sbr.rel (%p296) target = $region16
        $region15: #{decoder_layer_forward.1} parent=11 // pred_region
          _
        $region16: #{decoder_layer_forward.1} parent=11 // pred_fallthru
          _
        // Predicated region
        $region17: #{decoder_layer_forward.1} parent=11 // pred_check
          %p299 = pneg %p127
        $region18: #{decoder_layer_forward.1} parent=11 // pred_check_branch
          %301 = sbr.rel (%p299) target = $region20
        $region19: #{decoder_layer_forward.1} parent=11 // pred_region
          _
        $region20: #{decoder_layer_forward.1} parent=11 // pred_fallthru
          _
        // Predicated region
        $region21: #{decoder_layer_forward.1} parent=11 // pred_check
          %p302 = pneg %p148
        $region22: #{decoder_layer_forward.1} parent=11 // pred_check_branch
          %304 = sbr.rel (%p302) target = $region24
        $region23: #{decoder_layer_forward.1} parent=11 // pred_region
          _
        $region24: #{decoder_layer_forward.1} parent=11 // pred_fallthru
          _
        // Predicated region
        $region25: #{decoder_layer_forward.1} parent=11 // pred_check
          %p305 = pneg %p169
        $region26: #{decoder_layer_forward.1} parent=11 // pred_check_branch
          %307 = sbr.rel (%p305) target = $region28
        $region27: #{decoder_layer_forward.1} parent=11 // pred_region
          _
        $region28: #{decoder_layer_forward.1} parent=11 // pred_fallthru
          _
        // Predicated region
        $region29: #{decoder_layer_forward.1} parent=11 // pred_check
          %p308 = pneg %p190
        $region30: #{decoder_layer_forward.1} parent=11 // pred_check_branch
          %310 = sbr.rel (%p308) target = $region32
        $region31: #{decoder_layer_forward.1} parent=11 // pred_region
          _
        $region32: #{decoder_layer_forward.1} parent=11 // pred_fallthru
          _
        // Predicated region
        $region33: #{decoder_layer_forward.1} parent=11 // pred_check
          %p311 = pneg %p211
        $region34: #{decoder_layer_forward.1} parent=11 // pred_check_branch
          %313 = sbr.rel (%p311) target = $region36
        $region35: #{decoder_layer_forward.1} parent=11 // pred_region
          _
        $region36: #{decoder_layer_forward.1} parent=11 // pred_fallthru
          _
        // Predicated region
        $region37: #{decoder_layer_forward.1} parent=11 // pred_check
          %p314 = pneg %p232
        $region38: #{decoder_layer_forward.1} parent=11 // pred_check_branch
          %316 = sbr.rel (%p314) target = $region40
        $region39: #{decoder_layer_forward.1} parent=11 // pred_region
          _
        $region40: #{decoder_layer_forward.1} parent=11 // pred_fallthru
          _
        // Predicated region
        $region41: #{decoder_layer_forward.1} parent=11 // pred_check
          %p317 = pneg %p253
        $region42: #{decoder_layer_forward.1} parent=11 // pred_check_branch
          %319 = sbr.rel (%p317) target = $region44
        $region43: #{decoder_layer_forward.1} parent=11 // pred_region
          _
        $region44: #{decoder_layer_forward.1} parent=11 // pred_fallthru
          _
      $region12: #{decoder_layer_forward.1} parent=5 // pred_fallthru
        _
      %p320 = scmp.lt.s32.totalorder %s19, 2
      // Predicated region
      $region45: #{decoder_layer_forward.1} parent=5 // pred_check
        %p321 = pneg %p320
      $region46: #{decoder_layer_forward.1} parent=5 // pred_check_branch
        %323 = sbr.rel (%p321) target = $region48
      $region47: #{decoder_layer_forward.1} parent=5 // pred_region
        // Predicated region
        $region49: #{decoder_layer_forward.1} parent=47 // pred_check
          %p324 = pneg %p51
        $region50: #{decoder_layer_forward.1} parent=47 // pred_check_branch
          %326 = sbr.rel (%p324) target = $region52
        $region51: #{decoder_layer_forward.1} parent=47 // pred_region
          %p327 = scmp.lt.s32.totalorder %s26, 1
          %s328 = scalar_select %p327, %s26, 1
          %s329 = smul.addr %s328, 2
          %s330 = smul.addr %s329, 8
          %s331 = scalar_lea.vmem %s0, %s330
        $region52: #{decoder_layer_forward.1} parent=47 // pred_fallthru
          _
        // Predicated region
        $region53: #{decoder_layer_forward.1} parent=47 // pred_check
          %p332 = pneg %p79
        $region54: #{decoder_layer_forward.1} parent=47 // pred_check_branch
          %334 = sbr.rel (%p332) target = $region56
        $region55: #{decoder_layer_forward.1} parent=47 // pred_region
          %s335 = smul.u32 2, %s27
          %p336 = scmp.lt.s32.totalorder %s26, 1
          %s337 = scalar_select %p336, %s26, 1
          %p338 = scmp.lt.s32.totalorder %s335, 1
          %s339 = scalar_select %p338, %s335, 1
          %s340 = smul.addr %s337, 2
          %s341 = sadd.s32 %s339, %s340
          %s342 = smul.addr %s341, 2
          %s343 = scalar_lea.vmem %s1, %s342
          %s344 = smul.u32 2, %s27
        $region56: #{decoder_layer_forward.1} parent=47 // pred_fallthru
          _
      $region48: #{decoder_layer_forward.1} parent=5 // pred_fallthru
        _
      %p345 = scmp.le.s32.totalorder 1, %s19
      %p346 = scmp.lt.s32.totalorder %s19, 3
      %p347 = pnand %p345, %p346
      %p348 = pneg %p347
      // Predicated region
      $region57: #{decoder_layer_forward.1} parent=5 // pred_check
        _
      $region58: #{decoder_layer_forward.1} parent=5 // pred_check_branch
        %350 = sbr.rel (%p347) target = $region60
      $region59: #{decoder_layer_forward.1} parent=5 // pred_region
        %s351 = ssub.s32 %s19, 1
        %p352 = scmp.lt.s32.totalorder %s28, 1
        %s353 = scalar_select %p352, %s28, 1
        %s354 = smul.addr %s353, 2
        %s355 = smul.addr %s354, 8
        %s356 = scalar_lea.vmem %s0, %s355
        %p357 = pneg %p57
        %p358 = pneg %p54
        %s359 = smul.u32 2, %s29
        %p360 = scmp.lt.s32.totalorder %s28, 1
        %s361 = scalar_select %p360, %s28, 1
        %p362 = scmp.lt.s32.totalorder %s359, 1
        %s363 = scalar_select %p362, %s359, 1
        %s364 = smul.addr %s361, 2
        %s365 = sadd.s32 %s363, %s364
        %s366 = smul.addr %s365, 2
        %s367 = scalar_lea.vmem %s1, %s366
        %p368 = pneg %p85
        %p369 = pneg %p82
        %p370 = pneg %p106
        %p371 = pneg %p103
        %p372 = pneg %p127
        %p373 = pneg %p124
        %p374 = pneg %p148
        %p375 = pneg %p145
        %p376 = pneg %p169
        %p377 = pneg %p166
        %p378 = pneg %p190
        %p379 = pneg %p187
        %p380 = pneg %p211
        %p381 = pneg %p208
        %p382 = pneg %p232
        %p383 = pneg %p229
        %p384 = pneg %p253
        %p385 = pneg %p250
        %p386 = pneg %p281
        %p387 = pneg %p278
        %s388 = sand.u32 %s268, 1
        %s389 = scalar_lea.sflag [#allocation4], %s388
        %s390 = sand.u32 %s268, 1
        %s391 = smul.addr %s390, 16
        %s392 = scalar_lea.vmem [#allocation3], %s391
        %p393 = scmp.lt.s32.totalorder %s28, 1
        %s394 = scalar_select %p393, %s28, 1
        %s395 = smul.addr %s394, 2
        %s396 = smul.addr %s395, 8
        %s397 = scalar_lea.vmem %s0, %s396
        %s398 = smul.u32 2, %s29
        %p399 = scmp.lt.s32.totalorder %s28, 1
        %s400 = scalar_select %p399, %s28, 1
        %p401 = scmp.lt.s32.totalorder %s398, 1
        %s402 = scalar_select %p401, %s398, 1
        %s403 = smul.addr %s400, 2
        %s404 = sadd.s32 %s402, %s403
        %s405 = smul.addr %s404, 2
        %s406 = scalar_lea.vmem %s1, %s405
        %s407 = smul.u32 2, %s29
        %s408 = smul.u32 2, %s29
        %p412 = scmp.eq.s32.totalorder %s29, 0
        // Predicated region
        $region61: #{decoder_layer_forward.1} parent=59 // pred_check
          %p413 = pneg %p412
        $region62: #{decoder_layer_forward.1} parent=59 // pred_check_branch
          %415 = sbr.rel (%p413) target = $region64
        $region63: #{decoder_layer_forward.1} parent=59 // pred_region
          %v416 = vld [vmem:[%s397] sm:$0xff]
          %v417 = vld [vmem:[%s397 + $0x8] sm:$0xff]
          %v418 = vpack.c.bf16 %v417, %v416
          %v419 = vld [vmem:[%s2 + $0x4] sm:$0xff]
          %v420 = vld [vmem:[%s2 + $0x10] sm:$0xff]
          %v421 = vld [vmem:[%s2 + $0x1c] sm:$0xff]
          %v422 = vld [vmem:[%s2 + $0x28] sm:$0xff]
          %v423 = vld [vmem:[%s2 + $0x34] sm:$0xff]
          %v424 = vld [vmem:[%s2 + $0x40] sm:$0xff]
          %v425 = vld [vmem:[%s2 + $0x4c] sm:$0xff]
          %v426 = vld [vmem:[%s2 + $0x58] sm:$0xff]
          %v427 = vld [vmem:[%s2 + $0x64] sm:$0xff]
          %v428 = vld [vmem:[%s2 + $0x70] sm:$0xff]
          %v429 = vld [vmem:[%s2 + $0x7c] sm:$0xff]
          %v430 = vld [vmem:[%s2 + $0x88] sm:$0xff]
          %v431 = vld [vmem:[%s2 + $0x94] sm:$0xff]
          %v432 = vld [vmem:[%s2 + $0xa0] sm:$0xff]
          %v433 = vld [vmem:[%s2 + $0xac] sm:$0xff]
          %v434 = vld [vmem:[%s2 + $0xb8] sm:$0xff]
          %v451 = vunpack.c.l.b16 %v419
          %v452 = vunpack.c.h.b16 %v419
          %v453 = vunpack.c.l.b16 %v420
          %v454 = vunpack.c.h.b16 %v420
          %v455 = vunpack.c.l.b16 %v421
          %v456 = vunpack.c.h.b16 %v421
          %v457 = vunpack.c.l.b16 %v422
          %v458 = vunpack.c.h.b16 %v422
          %v459 = vunpack.c.l.b16 %v423
          %v460 = vunpack.c.h.b16 %v423
          %v461 = vunpack.c.l.b16 %v424
          %v462 = vunpack.c.h.b16 %v424
          %v463 = vunpack.c.l.b16 %v425
          %v464 = vunpack.c.h.b16 %v425
          %v465 = vunpack.c.l.b16 %v426
          %v466 = vunpack.c.h.b16 %v426
          %v467 = vunpack.c.l.b16 %v427
          %v468 = vunpack.c.h.b16 %v427
          %v469 = vunpack.c.l.b16 %v428
          %v470 = vunpack.c.h.b16 %v428
          %v471 = vunpack.c.l.b16 %v429
          %v472 = vunpack.c.h.b16 %v429
          %v473 = vunpack.c.l.b16 %v430
          %v474 = vunpack.c.h.b16 %v430
          %v475 = vunpack.c.l.b16 %v431
          %v476 = vunpack.c.h.b16 %v431
          %v477 = vunpack.c.l.b16 %v432
          %v478 = vunpack.c.h.b16 %v432
          %v479 = vunpack.c.l.b16 %v433
          %v480 = vunpack.c.h.b16 %v433
          %v481 = vunpack.c.l.b16 %v434
          %v482 = vunpack.c.h.b16 %v434
          %v483 = vpack.c.b16 %v453, %v451
          %v484 = vpack.c.b16 %v454, %v452
          %v485 = vpack.c.b16 %v457, %v455
          %v486 = vpack.c.b16 %v458, %v456
          %v487 = vpack.c.b16 %v461, %v459
          %v488 = vpack.c.b16 %v462, %v460
          %v489 = vpack.c.b16 %v465, %v463
          %v490 = vpack.c.b16 %v466, %v464
          %v491 = vpack.c.b16 %v469, %v467
          %v492 = vpack.c.b16 %v470, %v468
          %v493 = vpack.c.b16 %v473, %v471
          %v494 = vpack.c.b16 %v474, %v472
          %v495 = vpack.c.b16 %v477, %v475
          %v496 = vpack.c.b16 %v478, %v476
          %v497 = vpack.c.b16 %v481, %v479
          %v498 = vpack.c.b16 %v482, %v480
          %515 = vmatprep.subr.bf16.mxu0 %v484
          %516 = vmatpush1.bf16.msra.mxu0 %v483
          %517 = vmatprep.subr.bf16.mxu0 %v486
          %518 = vmatpush1.bf16.msra.mxu0 %v485
          %519 = vmatprep.subr.bf16.mxu0 %v488
          %520 = vmatpush1.bf16.msra.mxu0 %v487
          %521 = vmatprep.subr.bf16.mxu0 %v490
          %522 = vmatpush1.bf16.msra.mxu0 %v489
          %523 = vmatprep.subr.bf16.mxu0 %v492
          %524 = vmatpush1.bf16.msra.mxu0 %v491
          %525 = vmatprep.subr.bf16.mxu0 %v494
          %526 = vmatpush1.bf16.msra.mxu0 %v493
          %527 = vmatprep.subr.bf16.mxu0 %v496
          %528 = vmatpush1.bf16.msra.mxu0 %v495
          %529 = vmatprep.subr.bf16.mxu0 %v498
          %530 = vmatpush1.bf16.msra.mxu0 %v497
          %531 = vmatprep.subr.bf16.mxu0 0
          %532 = vmatpush1.bf16.msra.mxu0 0
          %533 = vmatprep.subr.bf16.mxu0 0
          %534 = vmatpush1.bf16.msra.mxu0 0
          %535 = vmatprep.subr.bf16.mxu0 0
          %536 = vmatpush1.bf16.msra.mxu0 0
          %537 = vmatprep.subr.bf16.mxu0 0
          %538 = vmatpush1.bf16.msra.mxu0 0
          %539 = vmatprep.subr.bf16.mxu0 0
          %540 = vmatpush1.bf16.msra.mxu0 0
          %541 = vmatprep.subr.bf16.mxu0 0
          %542 = vmatpush1.bf16.msra.mxu0 0
          %543 = vmatprep.subr.bf16.mxu0 0
          %544 = vmatpush1.bf16.msra.mxu0 0
          %545 = vmatprep.subr.bf16.mxu0 0
          %546 = vmatpush1.bf16.msra.mxu0 0
          %547 = vmatprep.mubr.bf16.mxu0 0
          %548 = vmatmul.mubr.bf16.gmra.mrb[0].mxu0 %v418
          %v549 = vpop.f32.mrb[0].mxu0
          %v550 = vadd.f32 0.0, %v549
          %v551 = vpop.f32.mrb[0].mxu0
          %v552 = vadd.f32 0.0, %v551
          %v553 = vpop.f32.mrb[0].mxu0
          %v554 = vadd.f32 0.0, %v553
          %v555 = vpop.f32.mrb[0].mxu0
          %v556 = vadd.f32 0.0, %v555
          %557 = vdwg.mxu0
          %v558 = vpack.c.bf16 %v554, %v550
          %v559 = vpack.c.bf16 %v556, %v552
          %560 = vst [vmem:[#allocation2] sm:$0xff] %v558
          %561 = vst [vmem:[#allocation2 + $0x8] sm:$0xff] %v559
        $region64: #{decoder_layer_forward.1} parent=59 // pred_fallthru
          _
        %s562 = smul.u32 %s29, 16
        %s563 = scalar_lea.vmem %s397, %s562
        %v564 = vld [vmem:[%s563] sm:$0xff]
        %v565 = vld [vmem:[%s563 + $0x8] sm:$0xff]
        %v566 = vpack.c.bf16 %v565, %v564
        %v567 = vld [vmem:[%s2] sm:$0xf]
        %v568 = vld [vmem:[%s2 + $0xc] sm:$0xf]
        %v569 = vld [vmem:[%s2 + $0x18] sm:$0xf]
        %v570 = vld [vmem:[%s2 + $0x24] sm:$0xf]
        %v571 = vld [vmem:[%s2 + $0x30] sm:$0xf]
        %v572 = vld [vmem:[%s2 + $0x3c] sm:$0xf]
        %v573 = vld [vmem:[%s2 + $0x48] sm:$0xf]
        %v574 = vld [vmem:[%s2 + $0x54] sm:$0xf]
        %v575 = vld [vmem:[%s2 + $0x60] sm:$0xf]
        %v576 = vld [vmem:[%s2 + $0x6c] sm:$0xf]
        %v577 = vld [vmem:[%s2 + $0x78] sm:$0xf]
        %v578 = vld [vmem:[%s2 + $0x84] sm:$0xf]
        %v579 = vld [vmem:[%s2 + $0x90] sm:$0xf]
        %v580 = vld [vmem:[%s2 + $0x9c] sm:$0xf]
        %v581 = vld [vmem:[%s2 + $0xa8] sm:$0xf]
        %v582 = vld [vmem:[%s2 + $0xb4] sm:$0xf]
        %v599 = vunpack.c.l.b16 %v567
        %v600 = vunpack.c.l.b16 %v568
        %v601 = vunpack.c.l.b16 %v569
        %v602 = vunpack.c.l.b16 %v570
        %v603 = vunpack.c.l.b16 %v571
        %v604 = vunpack.c.l.b16 %v572
        %v605 = vunpack.c.l.b16 %v573
        %v606 = vunpack.c.l.b16 %v574
        %v607 = vunpack.c.l.b16 %v575
        %v608 = vunpack.c.l.b16 %v576
        %v609 = vunpack.c.l.b16 %v577
        %v610 = vunpack.c.l.b16 %v578
        %v611 = vunpack.c.l.b16 %v579
        %v612 = vunpack.c.l.b16 %v580
        %v613 = vunpack.c.l.b16 %v581
        %v614 = vunpack.c.l.b16 %v582
        %v615 = vpack.c.b16 %v600, %v599
        %v616 = vpack.c.b16 %v602, %v601
        %v617 = vpack.c.b16 %v604, %v603
        %v618 = vpack.c.b16 %v606, %v605
        %v619 = vpack.c.b16 %v608, %v607
        %v620 = vpack.c.b16 %v610, %v609
        %v621 = vpack.c.b16 %v612, %v611
        %v622 = vpack.c.b16 %v614, %v613
        %631 = vmatprep.subr.bf16.mxu0 0
        %632 = vmatpush1.bf16.msra.mxu0 %v615
        %633 = vmatprep.subr.bf16.mxu0 0
        %634 = vmatpush1.bf16.msra.mxu0 %v616
        %635 = vmatprep.subr.bf16.mxu0 0
        %636 = vmatpush1.bf16.msra.mxu0 %v617
        %637 = vmatprep.subr.bf16.mxu0 0
        %638 = vmatpush1.bf16.msra.mxu0 %v618
        %639 = vmatprep.subr.bf16.mxu0 0
        %640 = vmatpush1.bf16.msra.mxu0 %v619
        %641 = vmatprep.subr.bf16.mxu0 0
        %642 = vmatpush1.bf16.msra.mxu0 %v620
        %643 = vmatprep.subr.bf16.mxu0 0
        %644 = vmatpush1.bf16.msra.mxu0 %v621
        %645 = vmatprep.subr.bf16.mxu0 0
        %646 = vmatpush1.bf16.msra.mxu0 %v622
        %647 = vmatprep.subr.bf16.mxu0 0
        %648 = vmatpush1.bf16.msra.mxu0 0
        %649 = vmatprep.subr.bf16.mxu0 0
        %650 = vmatpush1.bf16.msra.mxu0 0
        %651 = vmatprep.subr.bf16.mxu0 0
        %652 = vmatpush1.bf16.msra.mxu0 0
        %653 = vmatprep.subr.bf16.mxu0 0
        %654 = vmatpush1.bf16.msra.mxu0 0
        %655 = vmatprep.subr.bf16.mxu0 0
        %656 = vmatpush1.bf16.msra.mxu0 0
        %657 = vmatprep.subr.bf16.mxu0 0
        %658 = vmatpush1.bf16.msra.mxu0 0
        %659 = vmatprep.subr.bf16.mxu0 0
        %660 = vmatpush1.bf16.msra.mxu0 0
        %661 = vmatprep.subr.bf16.mxu0 0
        %662 = vmatpush1.bf16.msra.mxu0 0
        %663 = vmatprep.mubr.bf16.mxu0 0
        %664 = vmatmul.mubr.bf16.gmra.mrb[0].mxu0 %v566
        %v665 = vpop.f32.mrb[0].mxu0
        %v666 = vadd.f32 0.0, %v665
        %v667 = vpop.f32.mrb[0].mxu0
        %v668 = vpop.f32.mrb[0].mxu0
        %v669 = vadd.f32 0.0, %v668
        %v670 = vpop.f32.mrb[0].mxu0
        %671 = vdwg.mxu0
        %v672 = vld [vmem:[#allocation2] sm:$0xff]
        %v673 = vld [vmem:[#allocation2 + $0x8] sm:$0xff]
        %v674 = vld [vmem:[%s406] sm:$0x3]
        %v675 = vld [vmem:[%s406 + $0x2] sm:$0x3]
        %v676 = vpack.c.bf16 %v669, %v666
        %vm677 = vcmask 261120
        %v679 = vsel %vm677, %v676, 0
        %v682 = vsel %vm677, %v672, 0
        %684 = vmatprep.subr.bf16.mxu0 0
        %685 = vmatpush1.bf16.xpose.msra.mxu0 %v682
        %686 = vmatprep.subr.bf16.mxu0 0
        %687 = vmatpush1.bf16.xpose.msra.mxu0 0
        %688 = vmatprep.subr.bf16.mxu0 0
        %689 = vmatpush1.bf16.xpose.msra.mxu0 0
        %690 = vmatprep.subr.bf16.mxu0 0
        %691 = vmatpush1.bf16.xpose.msra.mxu0 0
        %692 = vmatprep.subr.bf16.mxu0 0
        %693 = vmatpush1.bf16.xpose.msra.mxu0 0
        %694 = vmatprep.subr.bf16.mxu0 0
        %695 = vmatpush1.bf16.xpose.msra.mxu0 0
        %696 = vmatprep.subr.bf16.mxu0 0
        %697 = vmatpush1.bf16.xpose.msra.mxu0 0
        %698 = vmatprep.subr.bf16.mxu0 0
        %699 = vmatpush1.bf16.xpose.msra.mxu0 0
        %700 = vmatprep.subr.bf16.mxu0 0
        %701 = vmatpush1.bf16.xpose.msra.mxu0 0
        %702 = vmatprep.subr.bf16.mxu0 0
        %703 = vmatpush1.bf16.xpose.msra.mxu0 0
        %704 = vmatprep.subr.bf16.mxu0 0
        %705 = vmatpush1.bf16.xpose.msra.mxu0 0
        %706 = vmatprep.subr.bf16.mxu0 0
        %707 = vmatpush1.bf16.xpose.msra.mxu0 0
        %708 = vmatprep.subr.bf16.mxu0 0
        %709 = vmatpush1.bf16.xpose.msra.mxu0 0
        %710 = vmatprep.subr.bf16.mxu0 0
        %711 = vmatpush1.bf16.xpose.msra.mxu0 0
        %712 = vmatprep.subr.bf16.mxu0 0
        %713 = vmatpush1.bf16.xpose.msra.mxu0 0
        %714 = vmatprep.subr.bf16.mxu0 0
        %715 = vmatpush1.bf16.xpose.msra.mxu0 0
        %716 = vmatprep.mubr.bf16.mxu0 0
        %717 = vmatmul.mubr.bf16.gmra.mrb[0].mxu0 %v679
        %v718 = vpop.f32.mrb[0].mxu0
        %v719 = vadd.f32 0.0, %v718
        %v720 = vpop.f32.mrb[0].mxu0
        %v721 = vpop.f32.mrb[0].mxu0
        %v722 = vadd.f32 0.0, %v721
        %v723 = vpop.f32.mrb[0].mxu0
        %724 = vdwg.mxu0
        %v725 = vmul.f32 %v719, 0.17677669
        %v726 = vmul.f32 %v722, 0.17677669
        %vm727 = vnez %v674
        %vm728 = vnez %v675
        %v729 = vsel %vm727, 16843009, 0
        %v730 = vsel %vm728, 16843009, 0
        %v731 = vunpack.c.0.s8 %v729
        %v732 = vunpack.c.0.s8 %v730
        %vm733 = vcmp.ne.s32.totalorder %v731, 0
        %vm734 = vcmp.ne.s32.totalorder %v732, 0
        %v735 = vsel %vm733, -1e+09, %v725
        %v736 = vsel %vm734, -1e+09, %v726
        %vm737 = vcmask 130048
        %v738 = vsel %vm737, %v735, -inf
        %739 = vmax.xlane.f32.xlu0 %v738
        %v740 = vpop.xlane.xlu0 %739
        %v741 = vsel %vm737, %v736, -inf
        %742 = vmax.xlane.f32.xlu0 %v741
        %v743 = vpop.xlane.xlu0 %742
        %v744 = vsub.f32 %v735, %v740
        %v745 = vsub.f32 %v736, %v743
        %v746 = vmul.f32 %v744, 1.442695
        %v747 = vpow.pop %v746
        %v748 = vmul.f32 %v745, 1.442695
        %v749 = vpow.pop %v748
        %v750 = vsel %vm737, %v747, 0.0
        %751 = vadd.xlane.f32.xlu0 %v750
        %v752 = vpop.xlane.xlu0 %751
        %v753 = vsel %vm737, %v749, 0.0
        %754 = vadd.xlane.f32.xlu0 %v753
        %v755 = vpop.xlane.xlu0 %754
        %v756 = vrcp.pop %v752
        %v757 = vrcp.pop %v755
        %v758 = vmul.f32 %v747, %v756
        %v759 = vmul.f32 %v749, %v757
        %v760 = vpack.c.bf16 %v759, %v758
        %v762 = vsel %vm737, %v760, 0
        %764 = vmatprep.subr.bf16.mxu0 0
        %765 = vmatpush1.bf16.msra.mxu0 %v673
        %766 = vmatprep.subr.bf16.mxu0 0
        %767 = vmatpush1.bf16.msra.mxu0 0
        %768 = vmatprep.subr.bf16.mxu0 0
        %769 = vmatpush1.bf16.msra.mxu0 0
        %770 = vmatprep.subr.bf16.mxu0 0
        %771 = vmatpush1.bf16.msra.mxu0 0
        %772 = vmatprep.subr.bf16.mxu0 0
        %773 = vmatpush1.bf16.msra.mxu0 0
        %774 = vmatprep.subr.bf16.mxu0 0
        %775 = vmatpush1.bf16.msra.mxu0 0
        %776 = vmatprep.subr.bf16.mxu0 0
        %777 = vmatpush1.bf16.msra.mxu0 0
        %778 = vmatprep.subr.bf16.mxu0 0
        %779 = vmatpush1.bf16.msra.mxu0 0
        %780 = vmatprep.subr.bf16.mxu0 0
        %781 = vmatpush1.bf16.msra.mxu0 0
        %782 = vmatprep.subr.bf16.mxu0 0
        %783 = vmatpush1.bf16.msra.mxu0 0
        %784 = vmatprep.subr.bf16.mxu0 0
        %785 = vmatpush1.bf16.msra.mxu0 0
        %786 = vmatprep.subr.bf16.mxu0 0
        %787 = vmatpush1.bf16.msra.mxu0 0
        %788 = vmatprep.subr.bf16.mxu0 0
        %789 = vmatpush1.bf16.msra.mxu0 0
        %790 = vmatprep.subr.bf16.mxu0 0
        %791 = vmatpush1.bf16.msra.mxu0 0
        %792 = vmatprep.subr.bf16.mxu0 0
        %793 = vmatpush1.bf16.msra.mxu0 0
        %794 = vmatprep.subr.bf16.mxu0 0
        %795 = vmatpush1.bf16.msra.mxu0 0
        %796 = vmatprep.mubr.bf16.mxu0 0
        %797 = vmatmul.mubr.bf16.gmra.mrb[0].mxu0 %v762
        %v798 = vpop.f32.mrb[0].mxu0
        %v799 = vadd.f32 0.0, %v798
        %v800 = vpop.f32.mrb[0].mxu0
        %v801 = vpop.f32.mrb[0].mxu0
        %v802 = vadd.f32 0.0, %v801
        %v803 = vpop.f32.mrb[0].mxu0
        %804 = vdwg.mxu0
        %806 = vrot.lane.b32.xlu0 %v676, 96
        %v807 = vpop.permute.xlu0 %806
        %809 = vrot.lane.b32.xlu0 %v672, 96
        %v810 = vpop.permute.xlu0 %809
        %v812 = vsel %vm677, %v807, 0
        %v815 = vsel %vm677, %v810, 0
        %817 = vmatprep.subr.bf16.mxu0 0
        %818 = vmatpush1.bf16.xpose.msra.mxu0 %v815
        %819 = vmatprep.subr.bf16.mxu0 0
        %820 = vmatpush1.bf16.xpose.msra.mxu0 0
        %821 = vmatprep.subr.bf16.mxu0 0
        %822 = vmatpush1.bf16.xpose.msra.mxu0 0
        %823 = vmatprep.subr.bf16.mxu0 0
        %824 = vmatpush1.bf16.xpose.msra.mxu0 0
        %825 = vmatprep.subr.bf16.mxu0 0
        %826 = vmatpush1.bf16.xpose.msra.mxu0 0
        %827 = vmatprep.subr.bf16.mxu0 0
        %828 = vmatpush1.bf16.xpose.msra.mxu0 0
        %829 = vmatprep.subr.bf16.mxu0 0
        %830 = vmatpush1.bf16.xpose.msra.mxu0 0
        %831 = vmatprep.subr.bf16.mxu0 0
        %832 = vmatpush1.bf16.xpose.msra.mxu0 0
        %833 = vmatprep.subr.bf16.mxu0 0
        %834 = vmatpush1.bf16.xpose.msra.mxu0 0
        %835 = vmatprep.subr.bf16.mxu0 0
        %836 = vmatpush1.bf16.xpose.msra.mxu0 0
        %837 = vmatprep.subr.bf16.mxu0 0
        %838 = vmatpush1.bf16.xpose.msra.mxu0 0
        %839 = vmatprep.subr.bf16.mxu0 0
        %840 = vmatpush1.bf16.xpose.msra.mxu0 0
        %841 = vmatprep.subr.bf16.mxu0 0
        %842 = vmatpush1.bf16.xpose.msra.mxu0 0
        %843 = vmatprep.subr.bf16.mxu0 0
        %844 = vmatpush1.bf16.xpose.msra.mxu0 0
        %845 = vmatprep.subr.bf16.mxu0 0
        %846 = vmatpush1.bf16.xpose.msra.mxu0 0
        %847 = vmatprep.subr.bf16.mxu0 0
        %848 = vmatpush1.bf16.xpose.msra.mxu0 0
        %849 = vmatprep.mubr.bf16.mxu0 0
        %850 = vmatmul.mubr.bf16.gmra.mrb[0].mxu0 %v812
        %v851 = vpop.f32.mrb[0].mxu0
        %v852 = vadd.f32 0.0, %v851
        %v853 = vpop.f32.mrb[0].mxu0
        %v854 = vpop.f32.mrb[0].mxu0
        %v855 = vadd.f32 0.0, %v854
        %v856 = vpop.f32.mrb[0].mxu0
        %857 = vdwg.mxu0
        %v858 = vmul.f32 %v852, 0.17677669
        %v859 = vmul.f32 %v855, 0.17677669
        %v860 = vsel %vm733, -1e+09, %v858
        %v861 = vsel %vm734, -1e+09, %v859
        %v862 = vsel %vm737, %v860, -inf
        %863 = vmax.xlane.f32.xlu0 %v862
        %v864 = vpop.xlane.xlu0 %863
        %v865 = vsel %vm737, %v861, -inf
        %866 = vmax.xlane.f32.xlu0 %v865
        %v867 = vpop.xlane.xlu0 %866
        %v868 = vsub.f32 %v860, %v864
        %v869 = vsub.f32 %v861, %v867
        %v870 = vmul.f32 %v868, 1.442695
        %v871 = vpow.pop %v870
        %v872 = vmul.f32 %v869, 1.442695
        %v873 = vpow.pop %v872
        %v874 = vsel %vm737, %v871, 0.0
        %875 = vadd.xlane.f32.xlu0 %v874
        %v876 = vpop.xlane.xlu0 %875
        %v877 = vsel %vm737, %v873, 0.0
        %878 = vadd.xlane.f32.xlu0 %v877
        %v879 = vpop.xlane.xlu0 %878
        %v880 = vrcp.pop %v876
        %v881 = vrcp.pop %v879
        %v882 = vmul.f32 %v871, %v880
        %v883 = vmul.f32 %v873, %v881
        %v884 = vpack.c.bf16 %v883, %v882
        %886 = vrot.lane.b32.xlu0 %v673, 96
        %v887 = vpop.permute.xlu0 %886
        %v890 = vsel %vm737, %v884, 0
        %892 = vmatprep.subr.bf16.mxu0 0
        %893 = vmatpush1.bf16.msra.mxu0 %v887
        %894 = vmatprep.subr.bf16.mxu0 0
        %895 = vmatpush1.bf16.msra.mxu0 0
        %896 = vmatprep.subr.bf16.mxu0 0
        %897 = vmatpush1.bf16.msra.mxu0 0
        %898 = vmatprep.subr.bf16.mxu0 0
        %899 = vmatpush1.bf16.msra.mxu0 0
        %900 = vmatprep.subr.bf16.mxu0 0
        %901 = vmatpush1.bf16.msra.mxu0 0
        %902 = vmatprep.subr.bf16.mxu0 0
        %903 = vmatpush1.bf16.msra.mxu0 0
        %904 = vmatprep.subr.bf16.mxu0 0
        %905 = vmatpush1.bf16.msra.mxu0 0
        %906 = vmatprep.subr.bf16.mxu0 0
        %907 = vmatpush1.bf16.msra.mxu0 0
        %908 = vmatprep.subr.bf16.mxu0 0
        %909 = vmatpush1.bf16.msra.mxu0 0
        %910 = vmatprep.subr.bf16.mxu0 0
        %911 = vmatpush1.bf16.msra.mxu0 0
        %912 = vmatprep.subr.bf16.mxu0 0
        %913 = vmatpush1.bf16.msra.mxu0 0
        %914 = vmatprep.subr.bf16.mxu0 0
        %915 = vmatpush1.bf16.msra.mxu0 0
        %916 = vmatprep.subr.bf16.mxu0 0
        %917 = vmatpush1.bf16.msra.mxu0 0
        %918 = vmatprep.subr.bf16.mxu0 0
        %919 = vmatpush1.bf16.msra.mxu0 0
        %920 = vmatprep.subr.bf16.mxu0 0
        %921 = vmatpush1.bf16.msra.mxu0 0
        %922 = vmatprep.subr.bf16.mxu0 0
        %923 = vmatpush1.bf16.msra.mxu0 0
        %924 = vmatprep.mubr.bf16.mxu0 0
        %925 = vmatmul.mubr.bf16.gmra.mrb[0].mxu0 %v890
        %v926 = vpop.f32.mrb[0].mxu0
        %v927 = vadd.f32 0.0, %v926
        %v928 = vpop.f32.mrb[0].mxu0
        %v929 = vpop.f32.mrb[0].mxu0
        %v930 = vadd.f32 0.0, %v929
        %v931 = vpop.f32.mrb[0].mxu0
        %932 = vdwg.mxu0
        %933 = vrot.lane.b32.xlu0 %v676, 64
        %v934 = vpop.permute.xlu0 %933
        %935 = vrot.lane.b32.xlu0 %v672, 64
        %v936 = vpop.permute.xlu0 %935
        %v938 = vsel %vm677, %v934, 0
        %v941 = vsel %vm677, %v936, 0
        %943 = vmatprep.subr.bf16.mxu0 0
        %944 = vmatpush1.bf16.xpose.msra.mxu0 %v941
        %945 = vmatprep.subr.bf16.mxu0 0
        %946 = vmatpush1.bf16.xpose.msra.mxu0 0
        %947 = vmatprep.subr.bf16.mxu0 0
        %948 = vmatpush1.bf16.xpose.msra.mxu0 0
        %949 = vmatprep.subr.bf16.mxu0 0
        %950 = vmatpush1.bf16.xpose.msra.mxu0 0
        %951 = vmatprep.subr.bf16.mxu0 0
        %952 = vmatpush1.bf16.xpose.msra.mxu0 0
        %953 = vmatprep.subr.bf16.mxu0 0
        %954 = vmatpush1.bf16.xpose.msra.mxu0 0
        %955 = vmatprep.subr.bf16.mxu0 0
        %956 = vmatpush1.bf16.xpose.msra.mxu0 0
        %957 = vmatprep.subr.bf16.mxu0 0
        %958 = vmatpush1.bf16.xpose.msra.mxu0 0
        %959 = vmatprep.subr.bf16.mxu0 0
        %960 = vmatpush1.bf16.xpose.msra.mxu0 0
        %961 = vmatprep.subr.bf16.mxu0 0
        %962 = vmatpush1.bf16.xpose.msra.mxu0 0
        %963 = vmatprep.subr.bf16.mxu0 0
        %964 = vmatpush1.bf16.xpose.msra.mxu0 0
        %965 = vmatprep.subr.bf16.mxu0 0
        %966 = vmatpush1.bf16.xpose.msra.mxu0 0
        %967 = vmatprep.subr.bf16.mxu0 0
        %968 = vmatpush1.bf16.xpose.msra.mxu0 0
        %969 = vmatprep.subr.bf16.mxu0 0
        %970 = vmatpush1.bf16.xpose.msra.mxu0 0
        %971 = vmatprep.subr.bf16.mxu0 0
        %972 = vmatpush1.bf16.xpose.msra.mxu0 0
        %973 = vmatprep.subr.bf16.mxu0 0
        %974 = vmatpush1.bf16.xpose.msra.mxu0 0
        %975 = vmatprep.mubr.bf16.mxu0 0
        %976 = vmatmul.mubr.bf16.gmra.mrb[0].mxu0 %v938
        %v977 = vpop.f32.mrb[0].mxu0
        %v978 = vadd.f32 0.0, %v977
        %v979 = vpop.f32.mrb[0].mxu0
        %v980 = vpop.f32.mrb[0].mxu0
        %v981 = vadd.f32 0.0, %v980
        %v982 = vpop.f32.mrb[0].mxu0
        %983 = vdwg.mxu0
        %v984 = vmul.f32 %v978, 0.17677669
        %v985 = vmul.f32 %v981, 0.17677669
        %v986 = vsel %vm733, -1e+09, %v984
        %v987 = vsel %vm734, -1e+09, %v985
        %v988 = vsel %vm737, %v986, -inf
        %989 = vmax.xlane.f32.xlu0 %v988
        %v990 = vpop.xlane.xlu0 %989
        %v991 = vsel %vm737, %v987, -inf
        %992 = vmax.xlane.f32.xlu0 %v991
        %v993 = vpop.xlane.xlu0 %992
        %v994 = vsub.f32 %v986, %v990
        %v995 = vsub.f32 %v987, %v993
        %v996 = vmul.f32 %v994, 1.442695
        %v997 = vpow.pop %v996
        %v998 = vmul.f32 %v995, 1.442695
        %v999 = vpow.pop %v998
        %v1000 = vsel %vm737, %v997, 0.0
        %1001 = vadd.xlane.f32.xlu0 %v1000
        %v1002 = vpop.xlane.xlu0 %1001
        %v1003 = vsel %vm737, %v999, 0.0
        %1004 = vadd.xlane.f32.xlu0 %v1003
        %v1005 = vpop.xlane.xlu0 %1004
        %v1006 = vrcp.pop %v1002
        %v1007 = vrcp.pop %v1005
        %v1008 = vmul.f32 %v997, %v1006
        %v1009 = vmul.f32 %v999, %v1007
        %v1010 = vpack.c.bf16 %v1009, %v1008
        %1011 = vrot.lane.b32.xlu0 %v673, 64
        %v1012 = vpop.permute.xlu0 %1011
        %v1015 = vsel %vm737, %v1010, 0
        %1017 = vmatprep.subr.bf16.mxu0 0
        %1018 = vmatpush1.bf16.msra.mxu0 %v1012
        %1019 = vmatprep.subr.bf16.mxu0 0
        %1020 = vmatpush1.bf16.msra.mxu0 0
        %1021 = vmatprep.subr.bf16.mxu0 0
        %1022 = vmatpush1.bf16.msra.mxu0 0
        %1023 = vmatprep.subr.bf16.mxu0 0
        %1024 = vmatpush1.bf16.msra.mxu0 0
        %1025 = vmatprep.subr.bf16.mxu0 0
        %1026 = vmatpush1.bf16.msra.mxu0 0
        %1027 = vmatprep.subr.bf16.mxu0 0
        %1028 = vmatpush1.bf16.msra.mxu0 0
        %1029 = vmatprep.subr.bf16.mxu0 0
        %1030 = vmatpush1.bf16.msra.mxu0 0
        %1031 = vmatprep.subr.bf16.mxu0 0
        %1032 = vmatpush1.bf16.msra.mxu0 0
        %1033 = vmatprep.subr.bf16.mxu0 0
        %1034 = vmatpush1.bf16.msra.mxu0 0
        %1035 = vmatprep.subr.bf16.mxu0 0
        %1036 = vmatpush1.bf16.msra.mxu0 0
        %1037 = vmatprep.subr.bf16.mxu0 0
        %1038 = vmatpush1.bf16.msra.mxu0 0
        %1039 = vmatprep.subr.bf16.mxu0 0
        %1040 = vmatpush1.bf16.msra.mxu0 0
        %1041 = vmatprep.subr.bf16.mxu0 0
        %1042 = vmatpush1.bf16.msra.mxu0 0
        %1043 = vmatprep.subr.bf16.mxu0 0
        %1044 = vmatpush1.bf16.msra.mxu0 0
        %1045 = vmatprep.subr.bf16.mxu0 0
        %1046 = vmatpush1.bf16.msra.mxu0 0
        %1047 = vmatprep.subr.bf16.mxu0 0
        %1048 = vmatpush1.bf16.msra.mxu0 0
        %1049 = vmatprep.mubr.bf16.mxu0 0
        %1050 = vmatmul.mubr.bf16.gmra.mrb[0].mxu0 %v1015
        %v1051 = vpop.f32.mrb[0].mxu0
        %v1052 = vadd.f32 0.0, %v1051
        %v1053 = vpop.f32.mrb[0].mxu0
        %v1054 = vpop.f32.mrb[0].mxu0
        %v1055 = vadd.f32 0.0, %v1054
        %v1056 = vpop.f32.mrb[0].mxu0
        %1057 = vdwg.mxu0
        %1058 = vrot.lane.b32.xlu0 %v676, 32
        %v1059 = vpop.permute.xlu0 %1058
        %1060 = vrot.lane.b32.xlu0 %v672, 32
        %v1061 = vpop.permute.xlu0 %1060
        %v1063 = vsel %vm677, %v1059, 0
        %v1066 = vsel %vm677, %v1061, 0
        %1068 = vmatprep.subr.bf16.mxu0 0
        %1069 = vmatpush1.bf16.xpose.msra.mxu0 %v1066
        %1070 = vmatprep.subr.bf16.mxu0 0
        %1071 = vmatpush1.bf16.xpose.msra.mxu0 0
        %1072 = vmatprep.subr.bf16.mxu0 0
        %1073 = vmatpush1.bf16.xpose.msra.mxu0 0
        %1074 = vmatprep.subr.bf16.mxu0 0
        %1075 = vmatpush1.bf16.xpose.msra.mxu0 0
        %1076 = vmatprep.subr.bf16.mxu0 0
        %1077 = vmatpush1.bf16.xpose.msra.mxu0 0
        %1078 = vmatprep.subr.bf16.mxu0 0
        %1079 = vmatpush1.bf16.xpose.msra.mxu0 0
        %1080 = vmatprep.subr.bf16.mxu0 0
        %1081 = vmatpush1.bf16.xpose.msra.mxu0 0
        %1082 = vmatprep.subr.bf16.mxu0 0
        %1083 = vmatpush1.bf16.xpose.msra.mxu0 0
        %1084 = vmatprep.subr.bf16.mxu0 0
        %1085 = vmatpush1.bf16.xpose.msra.mxu0 0
        %1086 = vmatprep.subr.bf16.mxu0 0
        %1087 = vmatpush1.bf16.xpose.msra.mxu0 0
        %1088 = vmatprep.subr.bf16.mxu0 0
        %1089 = vmatpush1.bf16.xpose.msra.mxu0 0
        %1090 = vmatprep.subr.bf16.mxu0 0
        %1091 = vmatpush1.bf16.xpose.msra.mxu0 0
        %1092 = vmatprep.subr.bf16.mxu0 0
        %1093 = vmatpush1.bf16.xpose.msra.mxu0 0
        %1094 = vmatprep.subr.bf16.mxu0 0
        %1095 = vmatpush1.bf16.xpose.msra.mxu0 0
        %1096 = vmatprep.subr.bf16.mxu0 0
        %1097 = vmatpush1.bf16.xpose.msra.mxu0 0
        %1098 = vmatprep.subr.bf16.mxu0 0
        %1099 = vmatpush1.bf16.xpose.msra.mxu0 0
        %1100 = vmatprep.mubr.bf16.mxu0 0
        %1101 = vmatmul.mubr.bf16.gmra.mrb[0].mxu0 %v1063
        %v1102 = vpop.f32.mrb[0].mxu0
        %v1103 = vadd.f32 0.0, %v1102
        %v1104 = vpop.f32.mrb[0].mxu0
        %v1105 = vpop.f32.mrb[0].mxu0
        %v1106 = vadd.f32 0.0, %v1105
        %v1107 = vpop.f32.mrb[0].mxu0
        %1108 = vdwg.mxu0
        %v1109 = vmul.f32 %v1103, 0.17677669
        %v1110 = vmul.f32 %v1106, 0.17677669
        %v1111 = vsel %vm733, -1e+09, %v1109
        %v1112 = vsel %vm734, -1e+09, %v1110
        %v1113 = vsel %vm737, %v1111, -inf
        %1114 = vmax.xlane.f32.xlu0 %v1113
        %v1115 = vpop.xlane.xlu0 %1114
        %v1116 = vsel %vm737, %v1112, -inf
        %1117 = vmax.xlane.f32.xlu0 %v1116
        %v1118 = vpop.xlane.xlu0 %1117
        %v1119 = vsub.f32 %v1111, %v1115
        %v1120 = vsub.f32 %v1112, %v1118
        %v1121 = vmul.f32 %v1119, 1.442695
        %v1122 = vpow.pop %v1121
        %v1123 = vmul.f32 %v1120, 1.442695
        %v1124 = vpow.pop %v1123
        %v1125 = vsel %vm737, %v1122, 0.0
        %1126 = vadd.xlane.f32.xlu0 %v1125
        %v1127 = vpop.xlane.xlu0 %1126
        %v1128 = vsel %vm737, %v1124, 0.0
        %1129 = vadd.xlane.f32.xlu0 %v1128
        %v1130 = vpop.xlane.xlu0 %1129
        %v1131 = vrcp.pop %v1127
        %v1132 = vrcp.pop %v1130
        %v1133 = vmul.f32 %v1122, %v1131
        %v1134 = vmul.f32 %v1124, %v1132
        %v1135 = vpack.c.bf16 %v1134, %v1133
        %1136 = vrot.lane.b32.xlu0 %v673, 32
        %v1137 = vpop.permute.xlu0 %1136
        %v1140 = vsel %vm737, %v1135, 0
        %1142 = vmatprep.subr.bf16.mxu0 0
        %1143 = vmatpush1.bf16.msra.mxu0 %v1137
        %1144 = vmatprep.subr.bf16.mxu0 0
        %1145 = vmatpush1.bf16.msra.mxu0 0
        %1146 = vmatprep.subr.bf16.mxu0 0
        %1147 = vmatpush1.bf16.msra.mxu0 0
        %1148 = vmatprep.subr.bf16.mxu0 0
        %1149 = vmatpush1.bf16.msra.mxu0 0
        %1150 = vmatprep.subr.bf16.mxu0 0
        %1151 = vmatpush1.bf16.msra.mxu0 0
        %1152 = vmatprep.subr.bf16.mxu0 0
        %1153 = vmatpush1.bf16.msra.mxu0 0
        %1154 = vmatprep.subr.bf16.mxu0 0
        %1155 = vmatpush1.bf16.msra.mxu0 0
        %1156 = vmatprep.subr.bf16.mxu0 0
        %1157 = vmatpush1.bf16.msra.mxu0 0
        %1158 = vmatprep.subr.bf16.mxu0 0
        %1159 = vmatpush1.bf16.msra.mxu0 0
        %1160 = vmatprep.subr.bf16.mxu0 0
        %1161 = vmatpush1.bf16.msra.mxu0 0
        %1162 = vmatprep.subr.bf16.mxu0 0
        %1163 = vmatpush1.bf16.msra.mxu0 0
        %1164 = vmatprep.subr.bf16.mxu0 0
        %1165 = vmatpush1.bf16.msra.mxu0 0
        %1166 = vmatprep.subr.bf16.mxu0 0
        %1167 = vmatpush1.bf16.msra.mxu0 0
        %1168 = vmatprep.subr.bf16.mxu0 0
        %1169 = vmatpush1.bf16.msra.mxu0 0
        %1170 = vmatprep.subr.bf16.mxu0 0
        %1171 = vmatpush1.bf16.msra.mxu0 0
        %1172 = vmatprep.subr.bf16.mxu0 0
        %1173 = vmatpush1.bf16.msra.mxu0 0
        %1174 = vmatprep.mubr.bf16.mxu0 0
        %1175 = vmatmul.mubr.bf16.gmra.mrb[0].mxu0 %v1140
        %v1176 = vpop.f32.mrb[0].mxu0
        %v1177 = vadd.f32 0.0, %v1176
        %v1178 = vpop.f32.mrb[0].mxu0
        %v1179 = vpop.f32.mrb[0].mxu0
        %v1180 = vadd.f32 0.0, %v1179
        %v1181 = vpop.f32.mrb[0].mxu0
        %1182 = vdwg.mxu0
        %1185 = vrot.lane.b32.xlu0 %v927, 32
        %v1186 = vpop.permute.xlu0 %1185
        %1187 = vrot.lane.b32.xlu0 %v930, 32
        %v1188 = vpop.permute.xlu0 %1187
        %1193 = vrot.lane.b32.xlu0 %v1052, 64
        %v1194 = vpop.permute.xlu0 %1193
        %1195 = vrot.lane.b32.xlu0 %v1055, 64
        %v1196 = vpop.permute.xlu0 %1195
        %1201 = vrot.lane.b32.xlu0 %v1177, 96
        %v1202 = vpop.permute.xlu0 %1201
        %1203 = vrot.lane.b32.xlu0 %v1180, 96
        %v1204 = vpop.permute.xlu0 %1203
        %v1207 = vsel %vm677, %v799, %v1186
        %v1208 = vsel %vm677, %v802, %v1188
        %vm1209 = vcmask 523264
        %v1210 = vsel %vm1209, %v1207, %v1194
        %v1211 = vsel %vm1209, %v1208, %v1196
        %vm1212 = vcmask 785408
        %v1213 = vsel %vm1212, %v1210, %v1202
        %v1214 = vsel %vm1212, %v1211, %v1204
        %v1215 = vpack.c.bf16 %v1214, %v1213
        %v1216 = vld [vmem:[%s3] sm:$0xf]
        %v1217 = vld [vmem:[%s3 + $0x4] sm:$0xf]
        %v1218 = vld [vmem:[%s3 + $0x8] sm:$0xf]
        %v1219 = vld [vmem:[%s3 + $0xc] sm:$0xf]
        %v1220 = vld [vmem:[%s3 + $0x10] sm:$0xf]
        %v1221 = vld [vmem:[%s3 + $0x14] sm:$0xf]
        %v1222 = vld [vmem:[%s3 + $0x18] sm:$0xf]
        %v1223 = vld [vmem:[%s3 + $0x1c] sm:$0xf]
        %v1224 = vld [vmem:[%s3 + $0x20] sm:$0xf]
        %v1225 = vld [vmem:[%s3 + $0x24] sm:$0xf]
        %v1226 = vld [vmem:[%s3 + $0x28] sm:$0xf]
        %v1227 = vld [vmem:[%s3 + $0x2c] sm:$0xf]
        %v1228 = vld [vmem:[%s3 + $0x30] sm:$0xf]
        %v1229 = vld [vmem:[%s3 + $0x34] sm:$0xf]
        %v1230 = vld [vmem:[%s3 + $0x38] sm:$0xf]
        %v1231 = vld [vmem:[%s3 + $0x3c] sm:$0xf]
        %v1248 = vunpack.c.l.b16 %v1216
        %v1249 = vunpack.c.l.b16 %v1217
        %v1250 = vunpack.c.l.b16 %v1218
        %v1251 = vunpack.c.l.b16 %v1219
        %v1252 = vunpack.c.l.b16 %v1220
        %v1253 = vunpack.c.l.b16 %v1221
        %v1254 = vunpack.c.l.b16 %v1222
        %v1255 = vunpack.c.l.b16 %v1223
        %v1256 = vunpack.c.l.b16 %v1224
        %v1257 = vunpack.c.l.b16 %v1225
        %v1258 = vunpack.c.l.b16 %v1226
        %v1259 = vunpack.c.l.b16 %v1227
        %v1260 = vunpack.c.l.b16 %v1228
        %v1261 = vunpack.c.l.b16 %v1229
        %v1262 = vunpack.c.l.b16 %v1230
        %v1263 = vunpack.c.l.b16 %v1231
        %v1264 = vpack.c.b16 %v1249, %v1248
        %v1265 = vpack.c.b16 %v1251, %v1250
        %v1266 = vpack.c.b16 %v1253, %v1252
        %v1267 = vpack.c.b16 %v1255, %v1254
        %v1268 = vpack.c.b16 %v1257, %v1256
        %v1269 = vpack.c.b16 %v1259, %v1258
        %v1270 = vpack.c.b16 %v1261, %v1260
        %v1271 = vpack.c.b16 %v1263, %v1262
        %1280 = vmatprep.subr.bf16.mxu0 0
        %1281 = vmatpush1.bf16.msra.mxu0 %v1264
        %1282 = vmatprep.subr.bf16.mxu0 0
        %1283 = vmatpush1.bf16.msra.mxu0 %v1265
        %1284 = vmatprep.subr.bf16.mxu0 0
        %1285 = vmatpush1.bf16.msra.mxu0 %v1266
        %1286 = vmatprep.subr.bf16.mxu0 0
        %1287 = vmatpush1.bf16.msra.mxu0 %v1267
        %1288 = vmatprep.subr.bf16.mxu0 0
        %1289 = vmatpush1.bf16.msra.mxu0 %v1268
        %1290 = vmatprep.subr.bf16.mxu0 0
        %1291 = vmatpush1.bf16.msra.mxu0 %v1269
        %1292 = vmatprep.subr.bf16.mxu0 0
        %1293 = vmatpush1.bf16.msra.mxu0 %v1270
        %1294 = vmatprep.subr.bf16.mxu0 0
        %1295 = vmatpush1.bf16.msra.mxu0 %v1271
        %1296 = vmatprep.subr.bf16.mxu0 0
        %1297 = vmatpush1.bf16.msra.mxu0 0
        %1298 = vmatprep.subr.bf16.mxu0 0
        %1299 = vmatpush1.bf16.msra.mxu0 0
        %1300 = vmatprep.subr.bf16.mxu0 0
        %1301 = vmatpush1.bf16.msra.mxu0 0
        %1302 = vmatprep.subr.bf16.mxu0 0
        %1303 = vmatpush1.bf16.msra.mxu0 0
        %1304 = vmatprep.subr.bf16.mxu0 0
        %1305 = vmatpush1.bf16.msra.mxu0 0
        %1306 = vmatprep.subr.bf16.mxu0 0
        %1307 = vmatpush1.bf16.msra.mxu0 0
        %1308 = vmatprep.subr.bf16.mxu0 0
        %1309 = vmatpush1.bf16.msra.mxu0 0
        %1310 = vmatprep.subr.bf16.mxu0 0
        %1311 = vmatpush1.bf16.msra.mxu0 0
        %1312 = vmatprep.mubr.bf16.mxu0 0
        %1313 = vmatmul.mubr.bf16.gmra.mrb[0].mxu0 %v1215
        %v1314 = vpop.f32.mrb[0].mxu0
        %v1315 = vadd.f32 %v564, %v1314
        %v1316 = vpop.f32.mrb[0].mxu0
        %v1317 = vpop.f32.mrb[0].mxu0
        %v1318 = vadd.f32 %v565, %v1317
        %v1319 = vpop.f32.mrb[0].mxu0
        %1320 = vdwg.mxu0
        %v1321 = vld [vmem:[%s4] sm:$0x1]
        %v1322 = vld [vmem:[%s5] sm:$0x1]
        %1323 = vadd.xlane.f32.xlu0 %v1315
        %v1324 = vpop.xlane.xlu0 %1323
        %1325 = vadd.xlane.f32.xlu0 %v1318
        %v1326 = vpop.xlane.xlu0 %1325
        %v1327 = vrcp.pop 128.0
        %v1328 = vmul.f32 %v1324, %v1327
        %v1329 = vmul.f32 %v1326, %v1327
        %v1330 = vsub.f32 %v1315, %v1328
        %v1331 = vsub.f32 %v1318, %v1329
        %v1332 = vmul.f32 %v1330, %v1330
        %v1333 = vmul.f32 %v1331, %v1331
        %1334 = vadd.xlane.f32.xlu0 %v1332
        %v1335 = vpop.xlane.xlu0 %1334
        %1336 = vadd.xlane.f32.xlu0 %v1333
        %v1337 = vpop.xlane.xlu0 %1336
        %v1338 = vmul.f32 %v1335, %v1327
        %v1339 = vmul.f32 %v1337, %v1327
        %v1340 = vadd.f32 %v1338, 1e-05
        %v1341 = vadd.f32 %v1339, 1e-05
        %v1342 = vrsqrt.pop %v1340
        %v1343 = vrsqrt.pop %v1341
        %v1344 = vmul.f32 %v1330, %v1342
        %v1345 = vmul.f32 %v1331, %v1343
        %v1347 = vlaneseq
        %v1348 = vshrl.u32 %v1347, 7
        %v1349 = vsub.s32 0, %v1348
        %v1350 = vrot.slane %v1321, %v1349
        %v1352 = vmul.f32 %v1344, %v1350
        %v1353 = vmul.f32 %v1345, %v1350
        %v1355 = vlaneseq
        %v1356 = vshrl.u32 %v1355, 7
        %v1357 = vsub.s32 0, %v1356
        %v1358 = vrot.slane %v1322, %v1357
        %v1360 = vadd.f32 %v1352, %v1358
        %v1361 = vadd.f32 %v1353, %v1358
        %v1362 = vpack.c.bf16 %v1361, %v1360
        %v1363 = vld [vmem:[%s6] sm:$0xff]
        %v1364 = vld [vmem:[%s6 + $0x8] sm:$0xff]
        %v1365 = vld [vmem:[%s6 + $0x10] sm:$0xff]
        %v1366 = vld [vmem:[%s6 + $0x18] sm:$0xff]
        %v1367 = vld [vmem:[%s6 + $0x20] sm:$0xff]
        %v1368 = vld [vmem:[%s6 + $0x28] sm:$0xff]
        %v1369 = vld [vmem:[%s6 + $0x30] sm:$0xff]
        %v1370 = vld [vmem:[%s6 + $0x38] sm:$0xff]
        %v1371 = vld [vmem:[%s6 + $0x40] sm:$0xff]
        %v1372 = vld [vmem:[%s6 + $0x48] sm:$0xff]
        %v1373 = vld [vmem:[%s6 + $0x50] sm:$0xff]
        %v1374 = vld [vmem:[%s6 + $0x58] sm:$0xff]
        %v1375 = vld [vmem:[%s6 + $0x60] sm:$0xff]
        %v1376 = vld [vmem:[%s6 + $0x68] sm:$0xff]
        %v1377 = vld [vmem:[%s6 + $0x70] sm:$0xff]
        %v1378 = vld [vmem:[%s6 + $0x78] sm:$0xff]
        %v1395 = vunpack.c.l.b16 %v1363
        %v1396 = vunpack.c.h.b16 %v1363
        %v1397 = vunpack.c.l.b16 %v1364
        %v1398 = vunpack.c.h.b16 %v1364
        %v1399 = vunpack.c.l.b16 %v1365
        %v1400 = vunpack.c.h.b16 %v1365
        %v1401 = vunpack.c.l.b16 %v1366
        %v1402 = vunpack.c.h.b16 %v1366
        %v1403 = vunpack.c.l.b16 %v1367
        %v1404 = vunpack.c.h.b16 %v1367
        %v1405 = vunpack.c.l.b16 %v1368
        %v1406 = vunpack.c.h.b16 %v1368
        %v1407 = vunpack.c.l.b16 %v1369
        %v1408 = vunpack.c.h.b16 %v1369
        %v1409 = vunpack.c.l.b16 %v1370
        %v1410 = vunpack.c.h.b16 %v1370
        %v1411 = vunpack.c.l.b16 %v1371
        %v1412 = vunpack.c.h.b16 %v1371
        %v1413 = vunpack.c.l.b16 %v1372
        %v1414 = vunpack.c.h.b16 %v1372
        %v1415 = vunpack.c.l.b16 %v1373
        %v1416 = vunpack.c.h.b16 %v1373
        %v1417 = vunpack.c.l.b16 %v1374
        %v1418 = vunpack.c.h.b16 %v1374
        %v1419 = vunpack.c.l.b16 %v1375
        %v1420 = vunpack.c.h.b16 %v1375
        %v1421 = vunpack.c.l.b16 %v1376
        %v1422 = vunpack.c.h.b16 %v1376
        %v1423 = vunpack.c.l.b16 %v1377
        %v1424 = vunpack.c.h.b16 %v1377
        %v1425 = vunpack.c.l.b16 %v1378
        %v1426 = vunpack.c.h.b16 %v1378
        %v1427 = vpack.c.b16 %v1397, %v1395
        %v1428 = vpack.c.b16 %v1398, %v1396
        %v1429 = vpack.c.b16 %v1401, %v1399
        %v1430 = vpack.c.b16 %v1402, %v1400
        %v1431 = vpack.c.b16 %v1405, %v1403
        %v1432 = vpack.c.b16 %v1406, %v1404
        %v1433 = vpack.c.b16 %v1409, %v1407
        %v1434 = vpack.c.b16 %v1410, %v1408
        %v1435 = vpack.c.b16 %v1413, %v1411
        %v1436 = vpack.c.b16 %v1414, %v1412
        %v1437 = vpack.c.b16 %v1417, %v1415
        %v1438 = vpack.c.b16 %v1418, %v1416
        %v1439 = vpack.c.b16 %v1421, %v1419
        %v1440 = vpack.c.b16 %v1422, %v1420
        %v1441 = vpack.c.b16 %v1425, %v1423
        %v1442 = vpack.c.b16 %v1426, %v1424
        %1459 = vmatprep.subr.bf16.mxu0 %v1428
        %1460 = vmatpush1.bf16.msra.mxu0 %v1427
        %1461 = vmatprep.subr.bf16.mxu0 %v1430
        %1462 = vmatpush1.bf16.msra.mxu0 %v1429
        %1463 = vmatprep.subr.bf16.mxu0 %v1432
        %1464 = vmatpush1.bf16.msra.mxu0 %v1431
        %1465 = vmatprep.subr.bf16.mxu0 %v1434
        %1466 = vmatpush1.bf16.msra.mxu0 %v1433
        %1467 = vmatprep.subr.bf16.mxu0 %v1436
        %1468 = vmatpush1.bf16.msra.mxu0 %v1435
        %1469 = vmatprep.subr.bf16.mxu0 %v1438
        %1470 = vmatpush1.bf16.msra.mxu0 %v1437
        %1471 = vmatprep.subr.bf16.mxu0 %v1440
        %1472 = vmatpush1.bf16.msra.mxu0 %v1439
        %1473 = vmatprep.subr.bf16.mxu0 %v1442
        %1474 = vmatpush1.bf16.msra.mxu0 %v1441
        %1475 = vmatprep.subr.bf16.mxu0 0
        %1476 = vmatpush1.bf16.msra.mxu0 0
        %1477 = vmatprep.subr.bf16.mxu0 0
        %1478 = vmatpush1.bf16.msra.mxu0 0
        %1479 = vmatprep.subr.bf16.mxu0 0
        %1480 = vmatpush1.bf16.msra.mxu0 0
        %1481 = vmatprep.subr.bf16.mxu0 0
        %1482 = vmatpush1.bf16.msra.mxu0 0
        %1483 = vmatprep.subr.bf16.mxu0 0
        %1484 = vmatpush1.bf16.msra.mxu0 0
        %1485 = vmatprep.subr.bf16.mxu0 0
        %1486 = vmatpush1.bf16.msra.mxu0 0
        %1487 = vmatprep.subr.bf16.mxu0 0
        %1488 = vmatpush1.bf16.msra.mxu0 0
        %1489 = vmatprep.subr.bf16.mxu0 0
        %1490 = vmatpush1.bf16.msra.mxu0 0
        %1491 = vmatprep.mubr.bf16.mxu0 0
        %1492 = vmatmul.mubr.bf16.gmra.mrb[0].mxu0 %v1362
        %v1493 = vpop.f32.mrb[0].mxu0
        %v1494 = vadd.f32 0.0, %v1493
        %v1495 = vpop.f32.mrb[0].mxu0
        %v1496 = vadd.f32 0.0, %v1495
        %v1497 = vpop.f32.mrb[0].mxu0
        %v1498 = vadd.f32 0.0, %v1497
        %v1499 = vpop.f32.mrb[0].mxu0
        %v1500 = vadd.f32 0.0, %v1499
        %1501 = vdwg.mxu0
        %v1502 = vmax.f32 %v1494, 0.0
        %v1503 = vmax.f32 %v1496, 0.0
        %v1504 = vmax.f32 %v1498, 0.0
        %v1505 = vmax.f32 %v1500, 0.0
        %v1506 = vpack.c.bf16 %v1504, %v1502
        %v1507 = vpack.c.bf16 %v1505, %v1503
        %v1508 = vld [vmem:[%s7] sm:$0xf]
        %v1509 = vld [vmem:[%s7 + $0x4] sm:$0xf]
        %v1510 = vld [vmem:[%s7 + $0x8] sm:$0xf]
        %v1511 = vld [vmem:[%s7 + $0xc] sm:$0xf]
        %v1512 = vld [vmem:[%s7 + $0x10] sm:$0xf]
        %v1513 = vld [vmem:[%s7 + $0x14] sm:$0xf]
        %v1514 = vld [vmem:[%s7 + $0x18] sm:$0xf]
        %v1515 = vld [vmem:[%s7 + $0x1c] sm:$0xf]
        %v1516 = vld [vmem:[%s7 + $0x20] sm:$0xf]
        %v1517 = vld [vmem:[%s7 + $0x24] sm:$0xf]
        %v1518 = vld [vmem:[%s7 + $0x28] sm:$0xf]
        %v1519 = vld [vmem:[%s7 + $0x2c] sm:$0xf]
        %v1520 = vld [vmem:[%s7 + $0x30] sm:$0xf]
        %v1521 = vld [vmem:[%s7 + $0x34] sm:$0xf]
        %v1522 = vld [vmem:[%s7 + $0x38] sm:$0xf]
        %v1523 = vld [vmem:[%s7 + $0x3c] sm:$0xf]
        %v1524 = vld [vmem:[%s7 + $0x40] sm:$0xf]
        %v1525 = vld [vmem:[%s7 + $0x44] sm:$0xf]
        %v1526 = vld [vmem:[%s7 + $0x48] sm:$0xf]
        %v1527 = vld [vmem:[%s7 + $0x4c] sm:$0xf]
        %v1528 = vld [vmem:[%s7 + $0x50] sm:$0xf]
        %v1529 = vld [vmem:[%s7 + $0x54] sm:$0xf]
        %v1530 = vld [vmem:[%s7 + $0x58] sm:$0xf]
        %v1531 = vld [vmem:[%s7 + $0x5c] sm:$0xf]
        %v1532 = vld [vmem:[%s7 + $0x60] sm:$0xf]
        %v1533 = vld [vmem:[%s7 + $0x64] sm:$0xf]
        %v1534 = vld [vmem:[%s7 + $0x68] sm:$0xf]
        %v1535 = vld [vmem:[%s7 + $0x6c] sm:$0xf]
        %v1536 = vld [vmem:[%s7 + $0x70] sm:$0xf]
        %v1537 = vld [vmem:[%s7 + $0x74] sm:$0xf]
        %v1538 = vld [vmem:[%s7 + $0x78] sm:$0xf]
        %v1539 = vld [vmem:[%s7 + $0x7c] sm:$0xf]
        %v1572 = vunpack.c.l.b16 %v1508
        %v1573 = vunpack.c.l.b16 %v1509
        %v1574 = vunpack.c.l.b16 %v1510
        %v1575 = vunpack.c.l.b16 %v1511
        %v1576 = vunpack.c.l.b16 %v1512
        %v1577 = vunpack.c.l.b16 %v1513
        %v1578 = vunpack.c.l.b16 %v1514
        %v1579 = vunpack.c.l.b16 %v1515
        %v1580 = vunpack.c.l.b16 %v1516
        %v1581 = vunpack.c.l.b16 %v1517
        %v1582 = vunpack.c.l.b16 %v1518
        %v1583 = vunpack.c.l.b16 %v1519
        %v1584 = vunpack.c.l.b16 %v1520
        %v1585 = vunpack.c.l.b16 %v1521
        %v1586 = vunpack.c.l.b16 %v1522
        %v1587 = vunpack.c.l.b16 %v1523
        %v1588 = vunpack.c.l.b16 %v1524
        %v1589 = vunpack.c.l.b16 %v1525
        %v1590 = vunpack.c.l.b16 %v1526
        %v1591 = vunpack.c.l.b16 %v1527
        %v1592 = vunpack.c.l.b16 %v1528
        %v1593 = vunpack.c.l.b16 %v1529
        %v1594 = vunpack.c.l.b16 %v1530
        %v1595 = vunpack.c.l.b16 %v1531
        %v1596 = vunpack.c.l.b16 %v1532
        %v1597 = vunpack.c.l.b16 %v1533
        %v1598 = vunpack.c.l.b16 %v1534
        %v1599 = vunpack.c.l.b16 %v1535
        %v1600 = vunpack.c.l.b16 %v1536
        %v1601 = vunpack.c.l.b16 %v1537
        %v1602 = vunpack.c.l.b16 %v1538
        %v1603 = vunpack.c.l.b16 %v1539
        %v1604 = vpack.c.b16 %v1573, %v1572
        %v1605 = vpack.c.b16 %v1575, %v1574
        %v1606 = vpack.c.b16 %v1577, %v1576
        %v1607 = vpack.c.b16 %v1579, %v1578
        %v1608 = vpack.c.b16 %v1581, %v1580
        %v1609 = vpack.c.b16 %v1583, %v1582
        %v1610 = vpack.c.b16 %v1585, %v1584
        %v1611 = vpack.c.b16 %v1587, %v1586
        %v1612 = vpack.c.b16 %v1589, %v1588
        %v1613 = vpack.c.b16 %v1591, %v1590
        %v1614 = vpack.c.b16 %v1593, %v1592
        %v1615 = vpack.c.b16 %v1595, %v1594
        %v1616 = vpack.c.b16 %v1597, %v1596
        %v1617 = vpack.c.b16 %v1599, %v1598
        %v1618 = vpack.c.b16 %v1601, %v1600
        %v1619 = vpack.c.b16 %v1603, %v1602
        %1636 = vmatprep.subr.bf16.mxu0 0
        %1637 = vmatpush1.bf16.msra.mxu0 %v1604
        %1638 = vmatprep.subr.bf16.mxu0 0
        %1639 = vmatpush1.bf16.msra.mxu0 %v1605
        %1640 = vmatprep.subr.bf16.mxu0 0
        %1641 = vmatpush1.bf16.msra.mxu0 %v1606
        %1642 = vmatprep.subr.bf16.mxu0 0
        %1643 = vmatpush1.bf16.msra.mxu0 %v1607
        %1644 = vmatprep.subr.bf16.mxu0 0
        %1645 = vmatpush1.bf16.msra.mxu0 %v1608
        %1646 = vmatprep.subr.bf16.mxu0 0
        %1647 = vmatpush1.bf16.msra.mxu0 %v1609
        %1648 = vmatprep.subr.bf16.mxu0 0
        %1649 = vmatpush1.bf16.msra.mxu0 %v1610
        %1650 = vmatprep.subr.bf16.mxu0 0
        %1651 = vmatpush1.bf16.msra.mxu0 %v1611
        %1652 = vmatprep.subr.bf16.mxu0 0
        %1653 = vmatpush1.bf16.msra.mxu0 %v1612
        %1654 = vmatprep.subr.bf16.mxu0 0
        %1655 = vmatpush1.bf16.msra.mxu0 %v1613
        %1656 = vmatprep.subr.bf16.mxu0 0
        %1657 = vmatpush1.bf16.msra.mxu0 %v1614
        %1658 = vmatprep.subr.bf16.mxu0 0
        %1659 = vmatpush1.bf16.msra.mxu0 %v1615
        %1660 = vmatprep.subr.bf16.mxu0 0
        %1661 = vmatpush1.bf16.msra.mxu0 %v1616
        %1662 = vmatprep.subr.bf16.mxu0 0
        %1663 = vmatpush1.bf16.msra.mxu0 %v1617
        %1664 = vmatprep.subr.bf16.mxu0 0
        %1665 = vmatpush1.bf16.msra.mxu0 %v1618
        %1666 = vmatprep.subr.bf16.mxu0 0
        %1667 = vmatpush1.bf16.msra.mxu0 %v1619
        %1668 = vmatprep.mubr.bf16.mxu0 %v1507
        %1669 = vmatmul.mubr.bf16.gmra.mrb[0].mxu0 %v1506
        %v1670 = vpop.f32.mrb[0].mxu0
        %v1671 = vadd.f32 %v1360, %v1670
        %v1672 = vpop.f32.mrb[0].mxu0
        %v1673 = vpop.f32.mrb[0].mxu0
        %v1674 = vadd.f32 %v1361, %v1673
        %v1675 = vpop.f32.mrb[0].mxu0
        %1676 = vdwg.mxu0
        %v1677 = vld [vmem:[%s8] sm:$0x1]
        %v1678 = vld [vmem:[%s9] sm:$0x1]
        %1679 = vadd.xlane.f32.xlu0 %v1671
        %v1680 = vpop.xlane.xlu0 %1679
        %1681 = vadd.xlane.f32.xlu0 %v1674
        %v1682 = vpop.xlane.xlu0 %1681
        %v1683 = vmul.f32 %v1680, %v1327
        %v1684 = vmul.f32 %v1682, %v1327
        %v1685 = vsub.f32 %v1671, %v1683
        %v1686 = vsub.f32 %v1674, %v1684
        %v1687 = vmul.f32 %v1685, %v1685
        %v1688 = vmul.f32 %v1686, %v1686
        %1689 = vadd.xlane.f32.xlu0 %v1687
        %v1690 = vpop.xlane.xlu0 %1689
        %1691 = vadd.xlane.f32.xlu0 %v1688
        %v1692 = vpop.xlane.xlu0 %1691
        %v1693 = vmul.f32 %v1690, %v1327
        %v1694 = vmul.f32 %v1692, %v1327
        %v1695 = vadd.f32 %v1693, 1e-05
        %v1696 = vadd.f32 %v1694, 1e-05
        %v1697 = vrsqrt.pop %v1695
        %v1698 = vrsqrt.pop %v1696
        %v1699 = vmul.f32 %v1685, %v1697
        %v1700 = vmul.f32 %v1686, %v1698
        %v1702 = vlaneseq
        %v1703 = vshrl.u32 %v1702, 7
        %v1704 = vsub.s32 0, %v1703
        %v1705 = vrot.slane %v1677, %v1704
        %v1707 = vmul.f32 %v1699, %v1705
        %v1708 = vmul.f32 %v1700, %v1705
        %v1710 = vlaneseq
        %v1711 = vshrl.u32 %v1710, 7
        %v1712 = vsub.s32 0, %v1711
        %v1713 = vrot.slane %v1678, %v1712
        %v1715 = vadd.f32 %v1707, %v1713
        %v1716 = vadd.f32 %v1708, %v1713
        %1717 = vst [vmem:[%s392] sm:$0xff] %v1715
        %1718 = vst [vmem:[%s392 + $0x8] sm:$0xff] %v1716
        %s1719 = sand.u32 %s268, 1
        %s1720 = scalar_lea.sflag [#allocation4], %s1719
        %s1721 = sand.u32 %s268, 1
        %s1722 = smul.addr %s1721, 16
        %s1723 = scalar_lea.vmem [#allocation3], %s1722
        // Predicated region
        $region65: #{decoder_layer_forward.1} parent=59 // pred_check
          %p1724 = pneg %p278
        $region66: #{decoder_layer_forward.1} parent=59 // pred_check_branch
          %1726 = sbr.rel (%p1724) target = $region68
        $region67: #{decoder_layer_forward.1} parent=59 // pred_region
          %s1727 = smul.u32 2, %s29
          %s1729 = ssub.s32 256, 256
          %1730 = vsyncadd %s1720, %s1729
          %s1731 = smul.addr %s28, 2
          %s1732 = sadd.s32 %s1727, %s1731
          %s1733 = smul.addr %s1732, 128
          %s1734 = scalar_lea.hbm %s10, %s1733
          %s1735 = sshll.u32 %s1723, 4
          %s1736 = int_to_ptr.vmem [resolvable:$true] %s1735
          %1741 = dma.vmem_to_hbm [thread:$0]  %s1736, 256, %s1734, %s1720, 128, 128, 8
        $region68: #{decoder_layer_forward.1} parent=59 // pred_fallthru
          _
      $region60: #{decoder_layer_forward.1} parent=5 // pred_fallthru
        _
      %p1742 = scmp.le.s32.totalorder 2, %s19
      // Predicated region
      $region69: #{decoder_layer_forward.1} parent=5 // pred_check
        %p1743 = pneg %p1742
      $region70: #{decoder_layer_forward.1} parent=5 // pred_check_branch
        %1745 = sbr.rel (%p1743) target = $region72
      $region71: #{decoder_layer_forward.1} parent=5 // pred_region
        %s1746 = ssub.s32 %s19, 2
        // Predicated region
        $region73: #{decoder_layer_forward.1} parent=71 // pred_check
          %p1747 = pneg %p284
        $region74: #{decoder_layer_forward.1} parent=71 // pred_check_branch
          %1749 = sbr.rel (%p1747) target = $region76
        $region75: #{decoder_layer_forward.1} parent=71 // pred_region
          %s1750 = sand.u32 %s269, 1
          %s1751 = scalar_lea.sflag [#allocation4], %s1750
          %s1752 = sand.u32 %s269, 1
          %s1753 = smul.addr %s1752, 16
          %s1754 = scalar_lea.vmem [#allocation3], %s1753
          %1755 = dma.done %s1751, 256
        $region76: #{decoder_layer_forward.1} parent=71 // pred_fallthru
          _
      $region72: #{decoder_layer_forward.1} parent=5 // pred_fallthru
        _
    $region6: #{decoder_layer_forward.1} parent=1 // loop_footer
      %s23 = sadd.s32 1, %s19
    $region7: #{decoder_layer_forward.1} parent=1 // loop_footer_branch
      %18 = sbr.rel target = $region3
    $region8: #{decoder_layer_forward.1} parent=1 // loop_exit
      _
    %1756 = vsyncpa [#allocation4], 1
    %s1757 = scalar_lea.sflag [#allocation4], 1
    %1758 = vsyncpa %s1757, 1

</llo_original>
